<compile_context>
chip_gen: v6e
topology: v6e:2x2x1
jax: 0.10.0
libtpu: 0.0.40
codegen_flags: <defaults>
</compile_context>

<pallas_src>
import functools

import jax
import jax.numpy as jnp
from jax.experimental import pallas as pl
from jax.experimental.pallas import tpu as pltpu

EPS = 1e-5


def _round_up(x, m):
    return (x + m - 1) // m * m


# ----------------------------------------------------------------------------
# Pallas kernels: single-K-step GEMM, fused bias (+ReLU) (+residual) epilogue,
# bf16 store.
# ----------------------------------------------------------------------------
def _conv_gemm_kernel(w_ref, p_ref, bias_ref, o_ref, *, relu):
    acc = jnp.dot(w_ref[...], p_ref[...], preferred_element_type=jnp.float32)
    y = acc + bias_ref[...]
    if relu:
        y = jnp.maximum(y, 0.0)
    o_ref[...] = y.astype(o_ref.dtype)


def _conv_gemm_res_kernel(w_ref, p_ref, bias_ref, r_ref, o_ref):
    # conv2 of the block: BN (no ReLU) + fused residual skip-add.
    acc = jnp.dot(w_ref[...], p_ref[...], preferred_element_type=jnp.float32)
    y = acc + bias_ref[...] + r_ref[...].astype(jnp.float32)
    o_ref[...] = y.astype(o_ref.dtype)


def fused_gemm(w_t, patches, bias, relu, residual=None):
    """(Cout, K) @ (K, M) with fused bias/ReLU/residual epilogue.

    bf16 operands, f32 MXU accumulation, bf16 output.  Output layout is
    (Cout, M) so the lane dim (M = N*H*W) is dense.
    """
    Cout, K = w_t.shape
    K2, M = patches.shape
    assert K == K2

    # Cout on sublanes: pad to a multiple of 16 (bf16 sublane packing).
    Coutp = _round_up(max(Cout, 16), 16)

    # Lane tile: multiple of 128; keep >= 2 tiles so v7x megacore can split.
    M128 = _round_up(max(M, 128), 128)
    TM = min(256 if M128 <= 2048 else 512, M128)
    Mp = _round_up(M, TM)

    wp = w_t.astype(jnp.bfloat16)
    bp = bias.astype(jnp.float32)
    if Coutp != Cout:
        wp = jnp.pad(wp, ((0, Coutp - Cout), (0, 0)))
        bp = jnp.pad(bp, (0, Coutp - Cout))
    bp = bp.reshape(Coutp, 1)

    pp = patches
    if Mp != M:
        pp = jnp.pad(pp, ((0, 0), (0, Mp - M)))

    in_specs = [
        pl.BlockSpec((Coutp, K), lambda i: (0, 0)),   # weights, resident
        pl.BlockSpec((K, TM), lambda i: (0, i)),      # patch tile
        pl.BlockSpec((Coutp, 1), lambda i: (0, 0)),   # bias, resident
    ]
    args = [wp, pp, bp]

    if residual is not None:
        rp = residual.astype(jnp.bfloat16)
        if Coutp != Cout or Mp != M:
            rp = jnp.pad(rp, ((0, Coutp - Cout), (0, Mp - M)))
        in_specs.append(pl.BlockSpec((Coutp, TM), lambda i: (0, i)))
        args.append(rp)
        kernel = _conv_gemm_res_kernel
    else:
        kernel = functools.partial(_conv_gemm_kernel, relu=relu)

    out = pl.pallas_call(
        kernel,
        out_shape=jax.ShapeDtypeStruct((Coutp, Mp), jnp.bfloat16),
        grid_spec=pltpu.PrefetchScalarGridSpec(
            num_scalar_prefetch=0,
            grid=(Mp // TM,),
            in_specs=in_specs,
            out_specs=pl.BlockSpec((Coutp, TM), lambda i: (0, i)),
        ),
        compiler_params=pltpu.CompilerParams(
            dimension_semantics=("parallel",),
        ),
    )(*args)
    return out[:Cout, :M]


# ----------------------------------------------------------------------------
# Plain-JAX glue: channel-first im2col, conv + folded-BN wrapper.
# ----------------------------------------------------------------------------
def im2col_cf(x_cf, kh, kw):
    """x_cf: (C, N, H, W) -> (C*kh*kw, N*H*W), stride 1, pad 1.

    Row order is (c, i, j) which matches PyTorch's weight.reshape(Cout, -1).
    """
    C, N, H, W = x_cf.shape
    xp = jnp.pad(x_cf, ((0, 0), (0, 0), (1, 1), (1, 1)))
    taps = []
    for i in range(kh):
        for j in range(kw):
            taps.append(xp[:, :, i:i + H, j:j + W])
    p = jnp.stack(taps, axis=1)                    # (C, kh*kw, N, H, W)
    return p.reshape(C * kh * kw, N * H * W)


def conv_bn(x_cf, conv, bn, relu, residual=None):
    """3x3/s1/p1 Conv2d + folded BN (+ReLU) on a channel-first activation.

    Returns the channel-first flat output (Cout, N*H*W) in bf16.  If
    `residual` ((Cout, N*H*W)) is given, the skip-add is fused in-kernel.
    """
    Cout = conv["w"].shape[0]
    patches = im2col_cf(x_cf, 3, 3)                         # (Cin*9, M) bf16

    scale = bn["gamma"] * jax.lax.rsqrt(bn["var"] + EPS)
    w_t = conv["w"].reshape(Cout, -1) * scale[:, None]      # BN scale folded, f32
    bias = bn["beta"] + scale * (conv["b"] - bn["mean"])

    return fused_gemm(w_t, patches, bias, relu, residual)   # (Cout, M) bf16


# ----------------------------------------------------------------------------
# ResidualBlock forward (mirrors the PyTorch module).
# ----------------------------------------------------------------------------
def residual_block_forward(params, x):
    N, C, H, W = x.shape
    M = N * H * W

    # One layout change in, one out: everything in between is channel-first.
    x_cf = jnp.transpose(x, (1, 0, 2, 3)).astype(jnp.bfloat16)   # (C, N, H, W)

    h = conv_bn(x_cf, params["conv1"], params["bn1"], relu=True)       # (C, M)
    h_cf = h.reshape(C, N, H, W)

    o = conv_bn(h_cf, params["conv2"], params["bn2"], relu=False,
                residual=x_cf.reshape(C, M))                           # (C, M)

    out = o.reshape(C, N, H, W).transpose(1, 0, 2, 3).astype(jnp.float32)
    return out


# ----------------------------------------------------------------------------
# Deterministic parameter initialization.
# ----------------------------------------------------------------------------
def _init_params(channels):
    base = jax.random.PRNGKey(0)
    cnt = [0]

    def nk():
        cnt[0] += 1
        return jax.random.fold_in(base, cnt[0])

    def conv_p(cin, cout, k):
        return dict(
            w=0.05 * jax.random.normal(nk(), (cout, cin, k, k), jnp.float32),
            b=0.05 * jax.random.normal(nk(), (cout,), jnp.float32))

    def bn_p(c):
        return dict(
            gamma=1.0 + 0.1 * jax.random.normal(nk(), (c,), jnp.float32),
            beta=0.1 * jax.random.normal(nk(), (c,), jnp.float32),
            mean=0.1 * jax.random.normal(nk(), (c,), jnp.float32),
            var=1.0 + 0.1 * jnp.abs(jax.random.normal(nk(), (c,), jnp.float32)))

    return dict(conv1=conv_p(channels, channels, 3), bn1=bn_p(channels),
                conv2=conv_p(channels, channels, 3), bn2=bn_p(channels))


# ----------------------------------------------------------------------------
# Pure-JAX reference (f32) for a sanity check.
# ----------------------------------------------------------------------------
def _ref_forward(params, x):
    def conv(x, p):
        y = jax.lax.conv_general_dilated(
            x, p["w"], (1, 1), ((1, 1), (1, 1)),
            dimension_numbers=("NCHW", "OIHW", "NCHW"))
        return y + p["b"][None, :, None, None]

    def bn(x, p):
        s = p["gamma"] / jnp.sqrt(p["var"] + EPS)
        return (s[None, :, None, None] * (x - p["mean"][None, :, None, None])
                + p["beta"][None, :, None, None])

    h = jax.nn.relu(bn(conv(x, params["conv1"]), params["bn1"]))
    h = bn(conv(h, params["conv2"]), params["bn2"])
    return h + x


if __name__ == "__main__":
    CHANNELS = 32
    params = _init_params(CHANNELS)
    x = jax.random.normal(jax.random.PRNGKey(0), (2, CHANNELS, 16, 16),
                          jnp.float32)

    fwd = jax.jit(residual_block_forward)
    out = fwd(params, x)
    jax.block_until_ready(out)

    assert out.shape == (2, CHANNELS, 16, 16)
    assert bool(jnp.all(jnp.isfinite(out)))

    ref = _ref_forward(params, x)
    # bf16 operands / activations / residual -> loose tolerance vs f32 ref.
    assert bool(jnp.allclose(out, ref, atol=1e-1, rtol=1e-1))

    print("KERNEL_OK")
</pallas_src>

<mosaic_0001>
module attributes {stable_mosaic.version = 11 : i64} {
  func.func @_conv_gemm_kernel(%arg0: i32, %arg1: memref<32x288xbf16, #tpu.memory_space<vmem>>, %arg2: memref<288x256xbf16, #tpu.memory_space<vmem>>, %arg3: memref<32x1xf32, #tpu.memory_space<vmem>>, %arg4: memref<32x256xbf16, #tpu.memory_space<vmem>>) attributes {dimension_semantics = [#tpu.dimension_semantics<parallel>], iteration_bounds = array<i64: 2>, scalar_prefetch = 0 : i64, scratch_operands = 0 : i64, tpu.core_type = #tpu.core_type<tc>, window_params = [{pipeline_mode = #tpu.pipeline_mode<synchronous>, transform_indices = @transform_0, window_bounds = array<i64: 32, 288>}, {transform_indices = @transform_1, window_bounds = array<i64: 288, 256>}, {pipeline_mode = #tpu.pipeline_mode<synchronous>, transform_indices = @transform_2, window_bounds = array<i64: 32, 1>}, {transform_indices = @transform_3, window_bounds = array<i64: 32, 256>}]} {
    %c0 = arith.constant 0 : index
    %c0_0 = arith.constant 0 : index
    %0 = vector.load %arg1[%c0, %c0_0] : memref<32x288xbf16, #tpu.memory_space<vmem>>, vector<32x288xbf16>
    %c0_1 = arith.constant 0 : index
    %c0_2 = arith.constant 0 : index
    %1 = vector.load %arg2[%c0_1, %c0_2] : memref<288x256xbf16, #tpu.memory_space<vmem>>, vector<288x256xbf16>
    %cst = arith.constant dense<0.000000e+00> : vector<32x256xf32>
    %2 = tpu.matmul %0, %1, %cst {dimension_numbers = #tpu.dot_dimension_numbers<[1], [0], [0], [1], [0, 0, 1, 1], [], []>} : vector<32x288xbf16>, vector<288x256xbf16>, vector<32x256xf32> -> vector<32x256xf32>
    %c0_3 = arith.constant 0 : index
    %c0_4 = arith.constant 0 : index
    %3 = vector.load %arg3[%c0_3, %c0_4] : memref<32x1xf32, #tpu.memory_space<vmem>>, vector<32x1xf32>
    %4 = vector.broadcast %3 : vector<32x1xf32> to vector<32x256xf32>
    %5 = arith.addf %2, %4 : vector<32x256xf32>
    %cst_5 = arith.constant 0.000000e+00 : f32
    %6 = vector.broadcast %cst_5 : f32 to vector<32x256xf32>
    %7 = arith.maximumf %5, %6 : vector<32x256xf32>
    %8 = arith.truncf %7 : vector<32x256xf32> to vector<32x256xbf16>
    %c0_6 = arith.constant 0 : index
    %c0_7 = arith.constant 0 : index
    %9 = vector.load %arg4[%c0_6, %c0_7] : memref<32x256xbf16, #tpu.memory_space<vmem>>, vector<32x256xbf16>
    tpu.vector_store %arg4[%c0_6, %c0_7], %8 {strides = array<i32>} : memref<32x256xbf16, #tpu.memory_space<vmem>>, vector<32x256xbf16>,
    return
  }
  func.func @transform_0(%arg0: i32) -> (i32, i32) {
    %c0_i32 = arith.constant 0 : i32
    %c0_i32_0 = arith.constant 0 : i32
    %c0_i32_1 = arith.constant 0 : i32
    return %c0_i32, %c0_i32_0 : i32, i32
  }
  func.func @transform_1(%arg0: i32) -> (i32, i32) {
    %c0_i32 = arith.constant 0 : i32
    %c0_i32_0 = arith.constant 0 : i32
    return %c0_i32, %arg0 : i32, i32
  }
  func.func @transform_2(%arg0: i32) -> (i32, i32) {
    %c0_i32 = arith.constant 0 : i32
    %c0_i32_0 = arith.constant 0 : i32
    %c0_i32_1 = arith.constant 0 : i32
    return %c0_i32, %c0_i32_0 : i32, i32
  }
  func.func @transform_3(%arg0: i32) -> (i32, i32) {
    %c0_i32 = arith.constant 0 : i32
    %c0_i32_0 = arith.constant 0 : i32
    return %c0_i32, %arg0 : i32, i32
  }
}

module attributes {stable_mosaic.version = 11 : i64} {
  func.func @_conv_gemm_res_kernel(%arg0: i32, %arg1: memref<32x288xbf16, #tpu.memory_space<vmem>>, %arg2: memref<288x256xbf16, #tpu.memory_space<vmem>>, %arg3: memref<32x1xf32, #tpu.memory_space<vmem>>, %arg4: memref<32x256xbf16, #tpu.memory_space<vmem>>, %arg5: memref<32x256xbf16, #tpu.memory_space<vmem>>) attributes {dimension_semantics = [#tpu.dimension_semantics<parallel>], iteration_bounds = array<i64: 2>, scalar_prefetch = 0 : i64, scratch_operands = 0 : i64, tpu.core_type = #tpu.core_type<tc>, window_params = [{pipeline_mode = #tpu.pipeline_mode<synchronous>, transform_indices = @transform_0, window_bounds = array<i64: 32, 288>}, {transform_indices = @transform_1, window_bounds = array<i64: 288, 256>}, {pipeline_mode = #tpu.pipeline_mode<synchronous>, transform_indices = @transform_2, window_bounds = array<i64: 32, 1>}, {transform_indices = @transform_3, window_bounds = array<i64: 32, 256>}, {transform_indices = @transform_4, window_bounds = array<i64: 32, 256>}]} {
    %c0 = arith.constant 0 : index
    %c0_0 = arith.constant 0 : index
    %0 = vector.load %arg1[%c0, %c0_0] : memref<32x288xbf16, #tpu.memory_space<vmem>>, vector<32x288xbf16>
    %c0_1 = arith.constant 0 : index
    %c0_2 = arith.constant 0 : index
    %1 = vector.load %arg2[%c0_1, %c0_2] : memref<288x256xbf16, #tpu.memory_space<vmem>>, vector<288x256xbf16>
    %cst = arith.constant dense<0.000000e+00> : vector<32x256xf32>
    %2 = tpu.matmul %0, %1, %cst {dimension_numbers = #tpu.dot_dimension_numbers<[1], [0], [0], [1], [0, 0, 1, 1], [], []>} : vector<32x288xbf16>, vector<288x256xbf16>, vector<32x256xf32> -> vector<32x256xf32>
    %c0_3 = arith.constant 0 : index
    %c0_4 = arith.constant 0 : index
    %3 = vector.load %arg3[%c0_3, %c0_4] : memref<32x1xf32, #tpu.memory_space<vmem>>, vector<32x1xf32>
    %4 = vector.broadcast %3 : vector<32x1xf32> to vector<32x256xf32>
    %5 = arith.addf %2, %4 : vector<32x256xf32>
    %c0_5 = arith.constant 0 : index
    %c0_6 = arith.constant 0 : index
    %6 = vector.load %arg4[%c0_5, %c0_6] : memref<32x256xbf16, #tpu.memory_space<vmem>>, vector<32x256xbf16>
    %7 = arith.extf %6 : vector<32x256xbf16> to vector<32x256xf32>
    %8 = arith.addf %5, %7 : vector<32x256xf32>
    %9 = arith.truncf %8 : vector<32x256xf32> to vector<32x256xbf16>
    %c0_7 = arith.constant 0 : index
    %c0_8 = arith.constant 0 : index
    %10 = vector.load %arg5[%c0_7, %c0_8] : memref<32x256xbf16, #tpu.memory_space<vmem>>, vector<32x256xbf16>
    tpu.vector_store %arg5[%c0_7, %c0_8], %9 {strides = array<i32>} : memref<32x256xbf16, #tpu.memory_space<vmem>>, vector<32x256xbf16>,
    return
  }
  func.func @transform_0(%arg0: i32) -> (i32, i32) {
    %c0_i32 = arith.constant 0 : i32
    %c0_i32_0 = arith.constant 0 : i32
    %c0_i32_1 = arith.constant 0 : i32
    return %c0_i32, %c0_i32_0 : i32, i32
  }
  func.func @transform_1(%arg0: i32) -> (i32, i32) {
    %c0_i32 = arith.constant 0 : i32
    %c0_i32_0 = arith.constant 0 : i32
    return %c0_i32, %arg0 : i32, i32
  }
  func.func @transform_2(%arg0: i32) -> (i32, i32) {
    %c0_i32 = arith.constant 0 : i32
    %c0_i32_0 = arith.constant 0 : i32
    %c0_i32_1 = arith.constant 0 : i32
    return %c0_i32, %c0_i32_0 : i32, i32
  }
  func.func @transform_3(%arg0: i32) -> (i32, i32) {
    %c0_i32 = arith.constant 0 : i32
    %c0_i32_0 = arith.constant 0 : i32
    return %c0_i32, %arg0 : i32, i32
  }
  func.func @transform_4(%arg0: i32) -> (i32, i32) {
    %c0_i32 = arith.constant 0 : i32
    %c0_i32_0 = arith.constant 0 : i32
    return %c0_i32, %arg0 : i32, i32
  }
}

</mosaic_0001>

<llo_original>
// kernel: residual_block_forward.2
$region0: #{residual_block_forward.2}
  #allocation0 [shape = 'u32[]', space=smem, size = 0x4, offset = 0x4, fixed_abs, tag = 'smem constant byte address 0x4 - core index']
  #allocation1 [shape = 'u32[144,128]{1,0:T(1,128)}', space=vmem, size = 0x12000, scoped, tag = 'internal scratch']
  %s0 = inlined_call_operand.vmem [shape: bf16[32,288], index: 0, kind: input, shape index: {}]
  %s1 = inlined_call_operand.vmem [shape: bf16[288,512], index: 1, kind: input, shape index: {}]
  %s2 = inlined_call_operand.vmem [shape: f32[32,1], index: 2, kind: input, shape index: {}]
  %s3 = inlined_call_operand.vmem [shape: bf16[32,512], index: 3, kind: output, shape index: {}]
  %s4 = sld [smem:[#allocation0]]
  $region117: #{residual_block_forward.2} parent=0
    _
  %s6 = ssub.s32 1, %s4
  %s7 = scalar_select 0, %s6, %s4
  $region1: #{residual_block_forward.2} parent=0
    #allocation2 [shape = 'u8[294912]{0}', space=vmem, size = 0x48000, scoped, tag = 'input window, operand 1']
    #allocation3 [shape = 'u8[32768]{0}', space=vmem, size = 0x8000, scoped, tag = 'output window, operand 0']
    loop: start=0, step=1, limit=4
    $region2: #{residual_block_forward.2} parent=1 // loop_pre_header
      _
    $region3: #{residual_block_forward.2} parent=1 // loop_header
      %s9 = sphi 0, %s13
      %p10 = scmp.ge.s32.totalorder %s9, 4
      %s17 = sphi 0, %s17
      %s19 = sphi 0, %s17
      %s20 = sphi 0, %s19
      %s34 = sphi 0, %s20
      %s40 = sphi 0, %s42
      %s43 = sphi 0, %s40
      %s44 = sphi 0, %s43
      %s60 = sphi 0, %s44
      %s64 = sphi 0, %s64
      %s66 = sphi 0, %s64
      %s67 = sphi 0, %s66
      %s81 = sphi 0, %s67
      %s87 = sphi 0, %s89
      %s90 = sphi 0, %s87
      %s91 = sphi 0, %s90
      %s107 = sphi 0, %s91
    $region4: #{residual_block_forward.2} parent=1 // loop_header_branch
      %12 = sbr.rel (%p10) target = $region8
    $region5: #{residual_block_forward.2} parent=1 // loop_body
      %s14 = ssub.s32 %s9, 1
      %s15 = ssub.s32 %s9, 2
      %s16 = sadd.s32 %s9, 1
      %s18 = sadd.s32 %s17, 1
      %p21 = scmp.eq.s32.totalorder %s9, 1
      %p22 = scmp.ne.s32.totalorder %s17, %s19
      %p23 = scmp.eq.s32.totalorder %s9, 0
      %p24 = por %p22, %p23
      %p25 = scmp.ne.s32.totalorder %s17, %s19
      %p26 = scmp.eq.s32.totalorder %s14, 1
      %p27 = por %p25, %p26
      %p28 = scmp.ne.s32.totalorder %s19, %s20
      %p29 = scmp.eq.s32.totalorder %s14, 0
      %p30 = por %p28, %p29
      %p31 = scmp.ne.s32.totalorder %s19, %s20
      %p32 = scmp.eq.s32.totalorder %s15, 1
      %p33 = por %p31, %p32
      %p35 = scmp.ne.s32.totalorder %s20, %s34
      %p36 = scmp.eq.s32.totalorder %s15, 0
      %p37 = por %p35, %p36
      %s38 = ssub.s32 %s9, %s16
      %p39 = scmp.eq.s32.totalorder %s38, 0
      %s41 = sadd.s32 %s40, 1
      %s42 = scalar_select %p39, %s40, %s41
      %p45 = pneg %p39
      %p46 = scmp.eq.s32.totalorder %s9, 1
      %p47 = por %p45, %p46
      %p48 = scmp.ne.s32.totalorder %s40, %s43
      %p49 = scmp.eq.s32.totalorder %s9, 0
      %p50 = por %p48, %p49
      %p51 = scmp.ne.s32.totalorder %s40, %s43
      %p52 = scmp.eq.s32.totalorder %s14, 1
      %p53 = por %p51, %p52
      %p54 = scmp.ne.s32.totalorder %s43, %s44
      %p55 = scmp.eq.s32.totalorder %s14, 0
      %p56 = por %p54, %p55
      %p57 = scmp.ne.s32.totalorder %s43, %s44
      %p58 = scmp.eq.s32.totalorder %s15, 1
      %p59 = por %p57, %p58
      %p61 = scmp.ne.s32.totalorder %s44, %s60
      %p62 = scmp.eq.s32.totalorder %s15, 0
      %p63 = por %p61, %p62
      %s65 = sadd.s32 %s64, 1
      %p68 = scmp.eq.s32.totalorder %s9, 1
      %p69 = scmp.ne.s32.totalorder %s64, %s66
      %p70 = scmp.eq.s32.totalorder %s9, 0
      %p71 = por %p69, %p70
      %p72 = scmp.ne.s32.totalorder %s64, %s66
      %p73 = scmp.eq.s32.totalorder %s14, 1
      %p74 = por %p72, %p73
      %p75 = scmp.ne.s32.totalorder %s66, %s67
      %p76 = scmp.eq.s32.totalorder %s14, 0
      %p77 = por %p75, %p76
      %p78 = scmp.ne.s32.totalorder %s66, %s67
      %p79 = scmp.eq.s32.totalorder %s15, 1
      %p80 = por %p78, %p79
      %p82 = scmp.ne.s32.totalorder %s67, %s81
      %p83 = scmp.eq.s32.totalorder %s15, 0
      %p84 = por %p82, %p83
      %s85 = ssub.s32 %s9, %s16
      %p86 = scmp.eq.s32.totalorder %s85, 0
      %s88 = sadd.s32 %s87, 1
      %s89 = scalar_select %p86, %s87, %s88
      %p92 = pneg %p86
      %p93 = scmp.eq.s32.totalorder %s9, 1
      %p94 = por %p92, %p93
      %p95 = scmp.ne.s32.totalorder %s87, %s90
      %p96 = scmp.eq.s32.totalorder %s9, 0
      %p97 = por %p95, %p96
      %p98 = scmp.ne.s32.totalorder %s87, %s90
      %p99 = scmp.eq.s32.totalorder %s14, 1
      %p100 = por %p98, %p99
      %p101 = scmp.ne.s32.totalorder %s90, %s91
      %p102 = scmp.eq.s32.totalorder %s14, 0
      %p103 = por %p101, %p102
      %p104 = scmp.ne.s32.totalorder %s90, %s91
      %p105 = scmp.eq.s32.totalorder %s15, 1
      %p106 = por %p104, %p105
      %p108 = scmp.ne.s32.totalorder %s91, %s107
      %p109 = scmp.eq.s32.totalorder %s15, 0
      %p110 = por %p108, %p109
      %p111 = scmp.le.s32.totalorder 1, %s9
      %p112 = scmp.lt.s32.totalorder %s9, 3
      %p113 = pnand %p111, %p112
      %p114 = pneg %p113
      // Predicated region
      $region9: #{residual_block_forward.2} parent=5 // pred_check
        _
      $region10: #{residual_block_forward.2} parent=5 // pred_check_branch
        %116 = sbr.rel (%p113) target = $region12
      $region11: #{residual_block_forward.2} parent=5 // pred_region
        %s117 = ssub.s32 %s9, 1
        // Predicated region
        $region13: #{residual_block_forward.2} parent=11 // pred_check
          %p118 = pneg %p30
        $region14: #{residual_block_forward.2} parent=11 // pred_check_branch
          %120 = sbr.rel (%p118) target = $region16
        $region15: #{residual_block_forward.2} parent=11 // pred_region
          _
        $region16: #{residual_block_forward.2} parent=11 // pred_fallthru
          _
        // Predicated region
        $region17: #{residual_block_forward.2} parent=11 // pred_check
          %p121 = pneg %p77
        $region18: #{residual_block_forward.2} parent=11 // pred_check_branch
          %123 = sbr.rel (%p121) target = $region20
        $region19: #{residual_block_forward.2} parent=11 // pred_region
          _
        $region20: #{residual_block_forward.2} parent=11 // pred_fallthru
          _
      $region12: #{residual_block_forward.2} parent=5 // pred_fallthru
        _
      %p124 = scmp.lt.s32.totalorder %s9, 2
      // Predicated region
      $region21: #{residual_block_forward.2} parent=5 // pred_check
        %p125 = pneg %p124
      $region22: #{residual_block_forward.2} parent=5 // pred_check_branch
        %127 = sbr.rel (%p125) target = $region24
      $region23: #{residual_block_forward.2} parent=5 // pred_region
        // Predicated region
        $region25: #{residual_block_forward.2} parent=23 // pred_check
          %p128 = pneg %p50
        $region26: #{residual_block_forward.2} parent=23 // pred_check_branch
          %130 = sbr.rel (%p128) target = $region28
        $region27: #{residual_block_forward.2} parent=23 // pred_region
          %s131 = sand.u32 %s40, 1
          %s132 = sand.u32 %s40, 1
          %s133 = smul.addr %s132, 288
          %s134 = scalar_lea.vmem [#allocation2], %s133
          %s135 = smul.u32 2, %s9
          %s136 = smul.addr %s135, 4
          %s137 = scalar_lea.vmem %s1, %s136
          // Predicated region
          $region29: #{residual_block_forward.2} parent=27 // pred_check
            _
          $region30: #{residual_block_forward.2} parent=27 // pred_check_branch
            %139 = sbr.rel (0) target = $region32
          $region31: #{residual_block_forward.2} parent=27 // pred_region
            // Predicated region
            $region33: #{residual_block_forward.2} parent=31 // pred_check
              _
            $region34: #{residual_block_forward.2} parent=31 // pred_check_branch
              %141 = sbr.rel (0) target = $region36
            $region35: #{residual_block_forward.2} parent=31 // pred_region
              // Predicated region
              $region48: #{residual_block_forward.2} parent=35 // pred_check
                _
              $region49: #{residual_block_forward.2} parent=35 // pred_check_branch
                %227 = sbr.rel (0) target = $region51
              $region50: #{residual_block_forward.2} parent=35 // pred_region
                loop: start=0, step=1, limit=1
                $region52: #{residual_block_forward.2} parent=50 // loop_pre_header
                  _
                $region53: #{residual_block_forward.2} parent=50 // loop_header
                  %s229 = sphi 0, %s233
                  %p230 = scmp.ge.s32.totalorder %s229, 1
                  %s234 = sphi %s137, %s137
                  %s235 = sphi %s134, %s134
                $region54: #{residual_block_forward.2} parent=50 // loop_header_branch
                  %232 = sbr.rel (%p230) target = $region58
                $region55: #{residual_block_forward.2} parent=50 // loop_body
                  %v236 = vld [vmem:[%s234] sm:$0xff]
                  %237 = vst [vmem:[%s235] sm:$0xff] %v236
                  %v238 = vld [vmem:[%s234 + $0x10] sm:$0xff]
                  %239 = vst [vmem:[%s235 + $0x8] sm:$0xff] %v238
                  %v240 = vld [vmem:[%s234 + $0x20] sm:$0xff]
                  %241 = vst [vmem:[%s235 + $0x10] sm:$0xff] %v240
                  %v242 = vld [vmem:[%s234 + $0x30] sm:$0xff]
                  %243 = vst [vmem:[%s235 + $0x18] sm:$0xff] %v242
                  %v244 = vld [vmem:[%s234 + $0x40] sm:$0xff]
                  %245 = vst [vmem:[%s235 + $0x20] sm:$0xff] %v244
                  %v246 = vld [vmem:[%s234 + $0x50] sm:$0xff]
                  %247 = vst [vmem:[%s235 + $0x28] sm:$0xff] %v246
                  %v248 = vld [vmem:[%s234 + $0x60] sm:$0xff]
                  %249 = vst [vmem:[%s235 + $0x30] sm:$0xff] %v248
                  %v250 = vld [vmem:[%s234 + $0x70] sm:$0xff]
                  %251 = vst [vmem:[%s235 + $0x38] sm:$0xff] %v250
                  %v252 = vld [vmem:[%s234 + $0x80] sm:$0xff]
                  %253 = vst [vmem:[%s235 + $0x40] sm:$0xff] %v252
                  %v254 = vld [vmem:[%s234 + $0x90] sm:$0xff]
                  %255 = vst [vmem:[%s235 + $0x48] sm:$0xff] %v254
                  %v256 = vld [vmem:[%s234 + $0xa0] sm:$0xff]
                  %257 = vst [vmem:[%s235 + $0x50] sm:$0xff] %v256
                  %v258 = vld [vmem:[%s234 + $0xb0] sm:$0xff]
                  %259 = vst [vmem:[%s235 + $0x58] sm:$0xff] %v258
                  %v260 = vld [vmem:[%s234 + $0xc0] sm:$0xff]
                  %261 = vst [vmem:[%s235 + $0x60] sm:$0xff] %v260
                  %v262 = vld [vmem:[%s234 + $0xd0] sm:$0xff]
                  %263 = vst [vmem:[%s235 + $0x68] sm:$0xff] %v262
                  %v264 = vld [vmem:[%s234 + $0xe0] sm:$0xff]
                  %265 = vst [vmem:[%s235 + $0x70] sm:$0xff] %v264
                  %v266 = vld [vmem:[%s234 + $0xf0] sm:$0xff]
                  %267 = vst [vmem:[%s235 + $0x78] sm:$0xff] %v266
                  %v268 = vld [vmem:[%s234 + $0x100] sm:$0xff]
                  %269 = vst [vmem:[%s235 + $0x80] sm:$0xff] %v268
                  %v270 = vld [vmem:[%s234 + $0x110] sm:$0xff]
                  %271 = vst [vmem:[%s235 + $0x88] sm:$0xff] %v270
                  %v272 = vld [vmem:[%s234 + $0x120] sm:$0xff]
                  %273 = vst [vmem:[%s235 + $0x90] sm:$0xff] %v272
                  %v274 = vld [vmem:[%s234 + $0x130] sm:$0xff]
                  %275 = vst [vmem:[%s235 + $0x98] sm:$0xff] %v274
                  %v276 = vld [vmem:[%s234 + $0x140] sm:$0xff]
                  %277 = vst [vmem:[%s235 + $0xa0] sm:$0xff] %v276
                  %v278 = vld [vmem:[%s234 + $0x150] sm:$0xff]
                  %279 = vst [vmem:[%s235 + $0xa8] sm:$0xff] %v278
                  %v280 = vld [vmem:[%s234 + $0x160] sm:$0xff]
                  %281 = vst [vmem:[%s235 + $0xb0] sm:$0xff] %v280
                  %v282 = vld [vmem:[%s234 + $0x170] sm:$0xff]
                  %283 = vst [vmem:[%s235 + $0xb8] sm:$0xff] %v282
                  %v284 = vld [vmem:[%s234 + $0x180] sm:$0xff]
                  %285 = vst [vmem:[%s235 + $0xc0] sm:$0xff] %v284
                  %v286 = vld [vmem:[%s234 + $0x190] sm:$0xff]
                  %287 = vst [vmem:[%s235 + $0xc8] sm:$0xff] %v286
                  %v288 = vld [vmem:[%s234 + $0x1a0] sm:$0xff]
                  %289 = vst [vmem:[%s235 + $0xd0] sm:$0xff] %v288
                  %v290 = vld [vmem:[%s234 + $0x1b0] sm:$0xff]
                  %291 = vst [vmem:[%s235 + $0xd8] sm:$0xff] %v290
                  %v292 = vld [vmem:[%s234 + $0x1c0] sm:$0xff]
                  %293 = vst [vmem:[%s235 + $0xe0] sm:$0xff] %v292
                  %v294 = vld [vmem:[%s234 + $0x1d0] sm:$0xff]
                  %295 = vst [vmem:[%s235 + $0xe8] sm:$0xff] %v294
                  %v296 = vld [vmem:[%s234 + $0x1e0] sm:$0xff]
                  %297 = vst [vmem:[%s235 + $0xf0] sm:$0xff] %v296
                  %v298 = vld [vmem:[%s234 + $0x1f0] sm:$0xff]
                  %299 = vst [vmem:[%s235 + $0xf8] sm:$0xff] %v298
                  %v300 = vld [vmem:[%s234 + $0x200] sm:$0xff]
                  %301 = vst [vmem:[%s235 + $0x100] sm:$0xff] %v300
                  %v302 = vld [vmem:[%s234 + $0x210] sm:$0xff]
                  %303 = vst [vmem:[%s235 + $0x108] sm:$0xff] %v302
                  %v304 = vld [vmem:[%s234 + $0x220] sm:$0xff]
                  %305 = vst [vmem:[%s235 + $0x110] sm:$0xff] %v304
                  %v306 = vld [vmem:[%s234 + $0x230] sm:$0xff]
                  %307 = vst [vmem:[%s235 + $0x118] sm:$0xff] %v306
                $region56: #{residual_block_forward.2} parent=50 // loop_footer
                  %s233 = sadd.s32 1, %s229
                $region57: #{residual_block_forward.2} parent=50 // loop_footer_branch
                  %228 = sbr.rel target = $region53
                $region58: #{residual_block_forward.2} parent=50 // loop_exit
                  _
              $region51: #{residual_block_forward.2} parent=35 // pred_fallthru
                _
              // Predicated region
              $region59: #{residual_block_forward.2} parent=35 // pred_check
                _
              $region60: #{residual_block_forward.2} parent=35 // pred_check_branch
                %309 = sbr.rel target = $region62
              $region61: #{residual_block_forward.2} parent=35 // pred_region
                _
              $region62: #{residual_block_forward.2} parent=35 // pred_fallthru
                _
            $region36: #{residual_block_forward.2} parent=31 // pred_fallthru
              _
            // Predicated region
            $region37: #{residual_block_forward.2} parent=31 // pred_check
              _
            $region38: #{residual_block_forward.2} parent=31 // pred_check_branch
              %143 = sbr.rel target = $region40
            $region39: #{residual_block_forward.2} parent=31 // pred_region
              %s145 = ssub.s32 256, 1
              loop: start=0, step=1, limit=1
              $region41: #{residual_block_forward.2} parent=39 // loop_pre_header
                _
              $region42: #{residual_block_forward.2} parent=39 // loop_header
                %s147 = sphi 0, %s151
                %p148 = scmp.ge.s32.totalorder %s147, 1
                %s152 = sphi %s137, %s137
                %s153 = sphi %s134, %s134
              $region43: #{residual_block_forward.2} parent=39 // loop_header_branch
                %150 = sbr.rel (%p148) target = $region47
              $region44: #{residual_block_forward.2} parent=39 // loop_body
                %v154 = vld [vmem:[%s152] sm:%s145]
                %155 = vst [vmem:[%s153] sm:%s145] %v154
                %v156 = vld [vmem:[%s152 + $0x10] sm:%s145]
                %157 = vst [vmem:[%s153 + $0x8] sm:%s145] %v156
                %v158 = vld [vmem:[%s152 + $0x20] sm:%s145]
                %159 = vst [vmem:[%s153 + $0x10] sm:%s145] %v158
                %v160 = vld [vmem:[%s152 + $0x30] sm:%s145]
                %161 = vst [vmem:[%s153 + $0x18] sm:%s145] %v160
                %v162 = vld [vmem:[%s152 + $0x40] sm:%s145]
                %163 = vst [vmem:[%s153 + $0x20] sm:%s145] %v162
                %v164 = vld [vmem:[%s152 + $0x50] sm:%s145]
                %165 = vst [vmem:[%s153 + $0x28] sm:%s145] %v164
                %v166 = vld [vmem:[%s152 + $0x60] sm:%s145]
                %167 = vst [vmem:[%s153 + $0x30] sm:%s145] %v166
                %v168 = vld [vmem:[%s152 + $0x70] sm:%s145]
                %169 = vst [vmem:[%s153 + $0x38] sm:%s145] %v168
                %v170 = vld [vmem:[%s152 + $0x80] sm:%s145]
                %171 = vst [vmem:[%s153 + $0x40] sm:%s145] %v170
                %v172 = vld [vmem:[%s152 + $0x90] sm:%s145]
                %173 = vst [vmem:[%s153 + $0x48] sm:%s145] %v172
                %v174 = vld [vmem:[%s152 + $0xa0] sm:%s145]
                %175 = vst [vmem:[%s153 + $0x50] sm:%s145] %v174
                %v176 = vld [vmem:[%s152 + $0xb0] sm:%s145]
                %177 = vst [vmem:[%s153 + $0x58] sm:%s145] %v176
                %v178 = vld [vmem:[%s152 + $0xc0] sm:%s145]
                %179 = vst [vmem:[%s153 + $0x60] sm:%s145] %v178
                %v180 = vld [vmem:[%s152 + $0xd0] sm:%s145]
                %181 = vst [vmem:[%s153 + $0x68] sm:%s145] %v180
                %v182 = vld [vmem:[%s152 + $0xe0] sm:%s145]
                %183 = vst [vmem:[%s153 + $0x70] sm:%s145] %v182
                %v184 = vld [vmem:[%s152 + $0xf0] sm:%s145]
                %185 = vst [vmem:[%s153 + $0x78] sm:%s145] %v184
                %v186 = vld [vmem:[%s152 + $0x100] sm:%s145]
                %187 = vst [vmem:[%s153 + $0x80] sm:%s145] %v186
                %v188 = vld [vmem:[%s152 + $0x110] sm:%s145]
                %189 = vst [vmem:[%s153 + $0x88] sm:%s145] %v188
                %v190 = vld [vmem:[%s152 + $0x120] sm:%s145]
                %191 = vst [vmem:[%s153 + $0x90] sm:%s145] %v190
                %v192 = vld [vmem:[%s152 + $0x130] sm:%s145]
                %193 = vst [vmem:[%s153 + $0x98] sm:%s145] %v192
                %v194 = vld [vmem:[%s152 + $0x140] sm:%s145]
                %195 = vst [vmem:[%s153 + $0xa0] sm:%s145] %v194
                %v196 = vld [vmem:[%s152 + $0x150] sm:%s145]
                %197 = vst [vmem:[%s153 + $0xa8] sm:%s145] %v196
                %v198 = vld [vmem:[%s152 + $0x160] sm:%s145]
                %199 = vst [vmem:[%s153 + $0xb0] sm:%s145] %v198
                %v200 = vld [vmem:[%s152 + $0x170] sm:%s145]
                %201 = vst [vmem:[%s153 + $0xb8] sm:%s145] %v200
                %v202 = vld [vmem:[%s152 + $0x180] sm:%s145]
                %203 = vst [vmem:[%s153 + $0xc0] sm:%s145] %v202
                %v204 = vld [vmem:[%s152 + $0x190] sm:%s145]
                %205 = vst [vmem:[%s153 + $0xc8] sm:%s145] %v204
                %v206 = vld [vmem:[%s152 + $0x1a0] sm:%s145]
                %207 = vst [vmem:[%s153 + $0xd0] sm:%s145] %v206
                %v208 = vld [vmem:[%s152 + $0x1b0] sm:%s145]
                %209 = vst [vmem:[%s153 + $0xd8] sm:%s145] %v208
                %v210 = vld [vmem:[%s152 + $0x1c0] sm:%s145]
                %211 = vst [vmem:[%s153 + $0xe0] sm:%s145] %v210
                %v212 = vld [vmem:[%s152 + $0x1d0] sm:%s145]
                %213 = vst [vmem:[%s153 + $0xe8] sm:%s145] %v212
                %v214 = vld [vmem:[%s152 + $0x1e0] sm:%s145]
                %215 = vst [vmem:[%s153 + $0xf0] sm:%s145] %v214
                %v216 = vld [vmem:[%s152 + $0x1f0] sm:%s145]
                %217 = vst [vmem:[%s153 + $0xf8] sm:%s145] %v216
                %v218 = vld [vmem:[%s152 + $0x200] sm:%s145]
                %219 = vst [vmem:[%s153 + $0x100] sm:%s145] %v218
                %v220 = vld [vmem:[%s152 + $0x210] sm:%s145]
                %221 = vst [vmem:[%s153 + $0x108] sm:%s145] %v220
                %v222 = vld [vmem:[%s152 + $0x220] sm:%s145]
                %223 = vst [vmem:[%s153 + $0x110] sm:%s145] %v222
                %v224 = vld [vmem:[%s152 + $0x230] sm:%s145]
                %225 = vst [vmem:[%s153 + $0x118] sm:%s145] %v224
              $region45: #{residual_block_forward.2} parent=39 // loop_footer
                %s151 = sadd.s32 1, %s147
              $region46: #{residual_block_forward.2} parent=39 // loop_footer_branch
                %146 = sbr.rel target = $region42
              $region47: #{residual_block_forward.2} parent=39 // loop_exit
                _
            $region40: #{residual_block_forward.2} parent=31 // pred_fallthru
              _
          $region32: #{residual_block_forward.2} parent=27 // pred_fallthru
            _
          %310 = vnop
        $region28: #{residual_block_forward.2} parent=23 // pred_fallthru
          _
      $region24: #{residual_block_forward.2} parent=5 // pred_fallthru
        _
      %p311 = scmp.le.s32.totalorder 1, %s9
      %p312 = scmp.lt.s32.totalorder %s9, 3
      %p313 = pnand %p311, %p312
      %p314 = pneg %p313
      // Predicated region
      $region63: #{residual_block_forward.2} parent=5 // pred_check
        _
      $region64: #{residual_block_forward.2} parent=5 // pred_check_branch
        %316 = sbr.rel (%p313) target = $region66
      $region65: #{residual_block_forward.2} parent=5 // pred_region
        %s317 = ssub.s32 %s9, 1
        %s318 = sand.u32 %s43, 1
        %s319 = sand.u32 %s43, 1
        %s320 = smul.addr %s319, 288
        %s321 = scalar_lea.vmem [#allocation2], %s320
        // Predicated region
        $region67: #{residual_block_forward.2} parent=65 // pred_check
          %p322 = pneg %p56
        $region68: #{residual_block_forward.2} parent=65 // pred_check_branch
          %324 = sbr.rel (%p322) target = $region70
        $region69: #{residual_block_forward.2} parent=65 // pred_region
          _
        $region70: #{residual_block_forward.2} parent=65 // pred_fallthru
          _
        %p325 = pneg %p30
        %p326 = pneg %p27
        %s327 = sand.u32 %s43, 1
        %s328 = sand.u32 %s43, 1
        %s329 = smul.addr %s328, 288
        %s330 = scalar_lea.vmem [#allocation2], %s329
        %p331 = pneg %p56
        %p332 = pneg %p53
        %p333 = pneg %p77
        %p334 = pneg %p74
        %p335 = pneg %p103
        %p336 = pneg %p100
        %s337 = sand.u32 %s90, 1
        %s338 = sand.u32 %s90, 1
        %s339 = smul.addr %s338, 32
        %s340 = scalar_lea.vmem [#allocation3], %s339
        %s341 = smul.u32 2, %s14
        %s342 = smul.u32 2, %s14
        %v344 = vld [vmem:[%s0] sm:$0xff]
        %v345 = vld [vmem:[%s0 + $0x8] sm:$0xf]
        %v346 = vld [vmem:[%s0 + $0xc] sm:$0xff]
        %v347 = vld [vmem:[%s0 + $0x14] sm:$0xf]
        %v348 = vld [vmem:[%s0 + $0x18] sm:$0xff]
        %v349 = vld [vmem:[%s0 + $0x20] sm:$0xf]
        %v350 = vld [vmem:[%s0 + $0x24] sm:$0xff]
        %v351 = vld [vmem:[%s0 + $0x2c] sm:$0xf]
        %v352 = vld [vmem:[%s321] sm:$0xff]
        %v353 = vld [vmem:[%s321 + $0x8] sm:$0xff]
        %v354 = vld [vmem:[%s321 + $0x10] sm:$0xff]
        %v355 = vld [vmem:[%s321 + $0x18] sm:$0xff]
        %v356 = vld [vmem:[%s321 + $0x20] sm:$0xff]
        %v357 = vld [vmem:[%s321 + $0x28] sm:$0xff]
        %v358 = vld [vmem:[%s321 + $0x30] sm:$0xff]
        %v359 = vld [vmem:[%s321 + $0x38] sm:$0xff]
        %v360 = vld [vmem:[%s321 + $0x40] sm:$0xff]
        %v361 = vld [vmem:[%s321 + $0x48] sm:$0xff]
        %v362 = vld [vmem:[%s321 + $0x50] sm:$0xff]
        %v363 = vld [vmem:[%s321 + $0x58] sm:$0xff]
        %v364 = vld [vmem:[%s321 + $0x60] sm:$0xff]
        %v365 = vld [vmem:[%s321 + $0x68] sm:$0xff]
        %v366 = vld [vmem:[%s321 + $0x70] sm:$0xff]
        %v367 = vld [vmem:[%s321 + $0x78] sm:$0xff]
        %v368 = vld [vmem:[%s321 + $0x80] sm:$0xff]
        %v369 = vld [vmem:[%s321 + $0x88] sm:$0xff]
        %v370 = vld [vmem:[%s321 + $0x90] sm:$0xff]
        %v371 = vld [vmem:[%s321 + $0x98] sm:$0xff]
        %v372 = vld [vmem:[%s321 + $0xa0] sm:$0xff]
        %v373 = vld [vmem:[%s321 + $0xa8] sm:$0xff]
        %v374 = vld [vmem:[%s321 + $0xb0] sm:$0xff]
        %v375 = vld [vmem:[%s321 + $0xb8] sm:$0xff]
        %v376 = vld [vmem:[%s321 + $0xc0] sm:$0xff]
        %v377 = vld [vmem:[%s321 + $0xc8] sm:$0xff]
        %v378 = vld [vmem:[%s321 + $0xd0] sm:$0xff]
        %v379 = vld [vmem:[%s321 + $0xd8] sm:$0xff]
        %v380 = vld [vmem:[%s321 + $0xe0] sm:$0xff]
        %v381 = vld [vmem:[%s321 + $0xe8] sm:$0xff]
        %v382 = vld [vmem:[%s321 + $0xf0] sm:$0xff]
        %v383 = vld [vmem:[%s321 + $0xf8] sm:$0xff]
        %v384 = vld [vmem:[%s321 + $0x100] sm:$0xff]
        %v385 = vld [vmem:[%s321 + $0x108] sm:$0xff]
        %v386 = vld [vmem:[%s321 + $0x110] sm:$0xff]
        %v387 = vld [vmem:[%s321 + $0x118] sm:$0xff]
        %v388 = vld [vmem:[%s2] sm:$0xff]
        %v389 = vld [vmem:[%s2 + $0x8] sm:$0xff]
        %v390 = vld [vmem:[%s2 + $0x10] sm:$0xff]
        %v391 = vld [vmem:[%s2 + $0x18] sm:$0xff]
        %393 = vset.pattern.permute.xlu0 0
        %394 = vperm.xlu0 %393, %v388
        %v395 = vpop.permute.xlu0 %394
        %398 = vset.pattern.permute.xlu0 0
        %399 = vperm.xlu0 %398, %v389
        %v400 = vpop.permute.xlu0 %399
        %403 = vset.pattern.permute.xlu0 0
        %404 = vperm.xlu0 %403, %v390
        %v405 = vpop.permute.xlu0 %404
        %408 = vset.pattern.permute.xlu0 0
        %409 = vperm.xlu0 %408, %v391
        %v410 = vpop.permute.xlu0 %409
        %v420 = vunpack.c.l.b16 %v344
        %v421 = vunpack.c.h.b16 %v344
        %v422 = vunpack.c.l.b16 %v345
        %v423 = vunpack.c.l.b16 %v346
        %v424 = vunpack.c.h.b16 %v346
        %v425 = vunpack.c.l.b16 %v347
        %v426 = vunpack.c.l.b16 %v348
        %v427 = vunpack.c.h.b16 %v348
        %v428 = vunpack.c.l.b16 %v349
        %v429 = vunpack.c.l.b16 %v350
        %v430 = vunpack.c.h.b16 %v350
        %v431 = vunpack.c.l.b16 %v351
        %v432 = vpack.c.b16 %v423, %v420
        %v433 = vpack.c.b16 %v424, %v421
        %v434 = vpack.c.b16 %v425, %v422
        %v435 = vpack.c.b16 %v429, %v426
        %v436 = vpack.c.b16 %v430, %v427
        %v437 = vpack.c.b16 %v431, %v428
        %v478 = vunpack.c.l.b16 %v352
        %v479 = vunpack.c.h.b16 %v352
        %v480 = vunpack.c.l.b16 %v353
        %v481 = vunpack.c.h.b16 %v353
        %v482 = vunpack.c.l.b16 %v354
        %v483 = vunpack.c.h.b16 %v354
        %v484 = vunpack.c.l.b16 %v355
        %v485 = vunpack.c.h.b16 %v355
        %v486 = vunpack.c.l.b16 %v356
        %v487 = vunpack.c.h.b16 %v356
        %v488 = vunpack.c.l.b16 %v357
        %v489 = vunpack.c.h.b16 %v357
        %v490 = vunpack.c.l.b16 %v358
        %v491 = vunpack.c.h.b16 %v358
        %v492 = vunpack.c.l.b16 %v359
        %v493 = vunpack.c.h.b16 %v359
        %v494 = vunpack.c.l.b16 %v360
        %v495 = vunpack.c.h.b16 %v360
        %v496 = vunpack.c.l.b16 %v361
        %v497 = vunpack.c.h.b16 %v361
        %v498 = vunpack.c.l.b16 %v362
        %v499 = vunpack.c.h.b16 %v362
        %v500 = vunpack.c.l.b16 %v363
        %v501 = vunpack.c.h.b16 %v363
        %v502 = vunpack.c.l.b16 %v364
        %v503 = vunpack.c.h.b16 %v364
        %v504 = vunpack.c.l.b16 %v365
        %v505 = vunpack.c.h.b16 %v365
        %v506 = vunpack.c.l.b16 %v366
        %v507 = vunpack.c.h.b16 %v366
        %v508 = vunpack.c.l.b16 %v367
        %v509 = vunpack.c.h.b16 %v367
        %v510 = vunpack.c.l.b16 %v368
        %v511 = vunpack.c.h.b16 %v368
        %v512 = vunpack.c.l.b16 %v369
        %v513 = vunpack.c.h.b16 %v369
        %v514 = vunpack.c.l.b16 %v370
        %v515 = vunpack.c.h.b16 %v370
        %v516 = vunpack.c.l.b16 %v371
        %v517 = vunpack.c.h.b16 %v371
        %v518 = vunpack.c.l.b16 %v372
        %v519 = vunpack.c.h.b16 %v372
        %v520 = vunpack.c.l.b16 %v373
        %v521 = vunpack.c.h.b16 %v373
        %v522 = vunpack.c.l.b16 %v374
        %v523 = vunpack.c.h.b16 %v374
        %v524 = vunpack.c.l.b16 %v375
        %v525 = vunpack.c.h.b16 %v375
        %v526 = vunpack.c.l.b16 %v376
        %v527 = vunpack.c.h.b16 %v376
        %v528 = vunpack.c.l.b16 %v377
        %v529 = vunpack.c.h.b16 %v377
        %v530 = vunpack.c.l.b16 %v378
        %v531 = vunpack.c.h.b16 %v378
        %v532 = vunpack.c.l.b16 %v379
        %v533 = vunpack.c.h.b16 %v379
        %v534 = vunpack.c.l.b16 %v380
        %v535 = vunpack.c.h.b16 %v380
        %v536 = vunpack.c.l.b16 %v381
        %v537 = vunpack.c.h.b16 %v381
        %v538 = vunpack.c.l.b16 %v382
        %v539 = vunpack.c.h.b16 %v382
        %v540 = vunpack.c.l.b16 %v383
        %v541 = vunpack.c.h.b16 %v383
        %v542 = vunpack.c.l.b16 %v384
        %v543 = vunpack.c.h.b16 %v384
        %v544 = vunpack.c.l.b16 %v385
        %v545 = vunpack.c.h.b16 %v385
        %v546 = vunpack.c.l.b16 %v386
        %v547 = vunpack.c.h.b16 %v386
        %v548 = vunpack.c.l.b16 %v387
        %v549 = vunpack.c.h.b16 %v387
        %v550 = vpack.c.b16 %v480, %v478
        %v551 = vpack.c.b16 %v481, %v479
        %v552 = vpack.c.b16 %v484, %v482
        %v553 = vpack.c.b16 %v485, %v483
        %v554 = vpack.c.b16 %v488, %v486
        %v555 = vpack.c.b16 %v489, %v487
        %v556 = vpack.c.b16 %v492, %v490
        %v557 = vpack.c.b16 %v493, %v491
        %v558 = vpack.c.b16 %v496, %v494
        %v559 = vpack.c.b16 %v497, %v495
        %v560 = vpack.c.b16 %v500, %v498
        %v561 = vpack.c.b16 %v501, %v499
        %v562 = vpack.c.b16 %v504, %v502
        %v563 = vpack.c.b16 %v505, %v503
        %v564 = vpack.c.b16 %v508, %v506
        %v565 = vpack.c.b16 %v509, %v507
        %v566 = vpack.c.b16 %v512, %v510
        %v567 = vpack.c.b16 %v513, %v511
        %v568 = vpack.c.b16 %v516, %v514
        %v569 = vpack.c.b16 %v517, %v515
        %v570 = vpack.c.b16 %v520, %v518
        %v571 = vpack.c.b16 %v521, %v519
        %v572 = vpack.c.b16 %v524, %v522
        %v573 = vpack.c.b16 %v525, %v523
        %v574 = vpack.c.b16 %v528, %v526
        %v575 = vpack.c.b16 %v529, %v527
        %v576 = vpack.c.b16 %v532, %v530
        %v577 = vpack.c.b16 %v533, %v531
        %v578 = vpack.c.b16 %v536, %v534
        %v579 = vpack.c.b16 %v537, %v535
        %v580 = vpack.c.b16 %v540, %v538
        %v581 = vpack.c.b16 %v541, %v539
        %v582 = vpack.c.b16 %v544, %v542
        %v583 = vpack.c.b16 %v545, %v543
        %v584 = vpack.c.b16 %v548, %v546
        %v585 = vpack.c.b16 %v549, %v547
        %vm622 = vcmask 261120
        %v624 = vsel %vm622, %v434, 0
        %v627 = vsel %vm622, %v437, 0
        %629 = vmatprep.subr.bf16.mxu0 %v565
        %630 = vmatpush1.bf16.msra.mxu0 %v564
        %631 = vmatprep.subr.bf16.mxu0 %v563
        %632 = vmatpush1.bf16.msra.mxu0 %v562
        %633 = vmatprep.subr.bf16.mxu0 %v561
        %634 = vmatpush1.bf16.msra.mxu0 %v560
        %635 = vmatprep.subr.bf16.mxu0 %v559
        %636 = vmatpush1.bf16.msra.mxu0 %v558
        %637 = vmatprep.subr.bf16.mxu0 %v557
        %638 = vmatpush1.bf16.msra.mxu0 %v556
        %639 = vmatprep.subr.bf16.mxu0 %v555
        %640 = vmatpush1.bf16.msra.mxu0 %v554
        %641 = vmatprep.subr.bf16.mxu0 %v553
        %642 = vmatpush1.bf16.msra.mxu0 %v552
        %643 = vmatprep.subr.bf16.mxu0 %v551
        %644 = vmatpush1.bf16.msra.mxu0 %v550
        %645 = vmatprep.subr.bf16.mxu0 %v581
        %646 = vmatpush2.bf16.msra.mxu0 %v580
        %647 = vmatprep.subr.bf16.mxu0 %v579
        %648 = vmatpush2.bf16.msra.mxu0 %v578
        %649 = vmatprep.subr.bf16.mxu0 %v577
        %650 = vmatpush2.bf16.msra.mxu0 %v576
        %651 = vmatprep.subr.bf16.mxu0 %v575
        %652 = vmatpush2.bf16.msra.mxu0 %v574
        %653 = vmatprep.subr.bf16.mxu0 %v573
        %654 = vmatpush2.bf16.msra.mxu0 %v572
        %655 = vmatprep.subr.bf16.mxu0 %v571
        %656 = vmatpush2.bf16.msra.mxu0 %v570
        %657 = vmatprep.subr.bf16.mxu0 %v569
        %658 = vmatpush2.bf16.msra.mxu0 %v568
        %659 = vmatprep.subr.bf16.mxu0 %v567
        %660 = vmatpush2.bf16.msra.mxu0 %v566
        %661 = vmatprep.mubr.bf16.mxu0 %v433
        %662 = vmatmul.mubr.bf16.gmra.mxu0 %v432
        %v663 = vpop.f32.mrf.mxu0
        %v664 = vadd.f32 %v395, %v663
        %v665 = vpop.f32.mrf.mxu0
        %v666 = vadd.f32 %v395, %v665
        %v667 = vpop.f32.mrf.mxu0
        %v668 = vadd.f32 %v400, %v667
        %v669 = vpop.f32.mrf.mxu0
        %v670 = vadd.f32 %v400, %v669
        %671 = vmatprep.mubr.bf16.mxu0 %v436
        %672 = vmatmul.mubr.bf16.gmra.mxu0 %v435
        %v673 = vpop.f32.mrf.mxu0
        %v674 = vadd.f32 %v405, %v673
        %v675 = vpop.f32.mrf.mxu0
        %v676 = vadd.f32 %v405, %v675
        %v677 = vpop.f32.mrf.mxu0
        %v678 = vadd.f32 %v410, %v677
        %v679 = vpop.f32.mrf.mxu0
        %v680 = vadd.f32 %v410, %v679
        %681 = vdwg.mxu0
        %682 = vmatprep.subr.bf16.mxu0 0
        %683 = vmatpush1.bf16.msra.mxu0 0
        %684 = vmatprep.subr.bf16.mxu0 0
        %685 = vmatpush1.bf16.msra.mxu0 0
        %686 = vmatprep.subr.bf16.mxu0 0
        %687 = vmatpush1.bf16.msra.mxu0 0
        %688 = vmatprep.subr.bf16.mxu0 0
        %689 = vmatpush1.bf16.msra.mxu0 0
        %690 = vmatprep.subr.bf16.mxu0 0
        %691 = vmatpush1.bf16.msra.mxu0 0
        %692 = vmatprep.subr.bf16.mxu0 0
        %693 = vmatpush1.bf16.msra.mxu0 0
        %694 = vmatprep.subr.bf16.mxu0 %v585
        %695 = vmatpush1.bf16.msra.mxu0 %v584
        %696 = vmatprep.subr.bf16.mxu0 %v583
        %697 = vmatpush1.bf16.msra.mxu0 %v582
        %698 = vmatprep.subr.bf16.mxu0 0
        %699 = vmatpush2.bf16.msra.mxu0 0
        %700 = vmatprep.subr.bf16.mxu0 0
        %701 = vmatpush2.bf16.msra.mxu0 0
        %702 = vmatprep.subr.bf16.mxu0 0
        %703 = vmatpush2.bf16.msra.mxu0 0
        %704 = vmatprep.subr.bf16.mxu0 0
        %705 = vmatpush2.bf16.msra.mxu0 0
        %706 = vmatprep.subr.bf16.mxu0 0
        %707 = vmatpush2.bf16.msra.mxu0 0
        %708 = vmatprep.subr.bf16.mxu0 0
        %709 = vmatpush2.bf16.msra.mxu0 0
        %710 = vmatprep.subr.bf16.mxu0 0
        %711 = vmatpush2.bf16.msra.mxu0 0
        %712 = vmatprep.subr.bf16.mxu0 0
        %713 = vmatpush2.bf16.msra.mxu0 0
        %714 = vmatprep.mubr.bf16.mxu0 0
        %715 = vmatmul.mubr.bf16.gmra.mxu0 %v624
        %v716 = vpop.f32.mrf.mxu0
        %v717 = vadd.f32 %v664, %v716
        %v718 = vpop.f32.mrf.mxu0
        %v719 = vadd.f32 %v666, %v718
        %v720 = vpop.f32.mrf.mxu0
        %v721 = vadd.f32 %v668, %v720
        %v722 = vpop.f32.mrf.mxu0
        %v723 = vadd.f32 %v670, %v722
        %724 = vmatprep.mubr.bf16.mxu0 0
        %725 = vmatmul.mubr.bf16.gmra.mxu0 %v627
        %v726 = vpop.f32.mrf.mxu0
        %v727 = vadd.f32 %v674, %v726
        %v728 = vpop.f32.mrf.mxu0
        %v729 = vadd.f32 %v676, %v728
        %v730 = vpop.f32.mrf.mxu0
        %v731 = vadd.f32 %v678, %v730
        %v732 = vpop.f32.mrf.mxu0
        %v733 = vadd.f32 %v680, %v732
        %734 = vdwg.mxu0
        %v735 = vmax.f32 %v717, 0.0
        %v736 = vmax.f32 %v719, 0.0
        %v737 = vmax.f32 %v721, 0.0
        %v738 = vmax.f32 %v723, 0.0
        %v739 = vmax.f32 %v727, 0.0
        %v740 = vmax.f32 %v729, 0.0
        %v741 = vmax.f32 %v731, 0.0
        %v742 = vmax.f32 %v733, 0.0
        %v743 = vpack.c.bf16 %v737, %v735
        %v744 = vpack.c.bf16 %v738, %v736
        %v745 = vpack.c.bf16 %v741, %v739
        %v746 = vpack.c.bf16 %v742, %v740
        %v751 = vunpack.c.l.b16 %v743
        %v752 = vunpack.c.l.b16 %v744
        %v753 = vunpack.c.h.b16 %v743
        %v754 = vunpack.c.h.b16 %v744
        %v755 = vunpack.c.l.b16 %v745
        %v756 = vunpack.c.l.b16 %v746
        %v757 = vunpack.c.h.b16 %v745
        %v758 = vunpack.c.h.b16 %v746
        %v759 = vpack.c.b16 %v752, %v751
        %v760 = vpack.c.b16 %v754, %v753
        %v761 = vpack.c.b16 %v756, %v755
        %v762 = vpack.c.b16 %v758, %v757
        %767 = vst [vmem:[%s340] sm:$0xff] %v759
        %768 = vst [vmem:[%s340 + $0x8] sm:$0xff] %v760
        %769 = vst [vmem:[%s340 + $0x10] sm:$0xff] %v761
        %770 = vst [vmem:[%s340 + $0x18] sm:$0xff] %v762
        %s771 = sand.u32 %s90, 1
        %s772 = sand.u32 %s90, 1
        %s773 = smul.addr %s772, 32
        %s774 = scalar_lea.vmem [#allocation3], %s773
        // Predicated region
        $region71: #{residual_block_forward.2} parent=65 // pred_check
          %p775 = pneg %p100
        $region72: #{residual_block_forward.2} parent=65 // pred_check_branch
          %777 = sbr.rel (%p775) target = $region74
        $region73: #{residual_block_forward.2} parent=65 // pred_region
          %s778 = smul.u32 2, %s14
          %s779 = smul.addr %s778, 4
          %s780 = scalar_lea.vmem %s3, %s779
          // Predicated region
          $region75: #{residual_block_forward.2} parent=73 // pred_check
            _
          $region76: #{residual_block_forward.2} parent=73 // pred_check_branch
            %782 = sbr.rel (0) target = $region78
          $region77: #{residual_block_forward.2} parent=73 // pred_region
            // Predicated region
            $region79: #{residual_block_forward.2} parent=77 // pred_check
              _
            $region80: #{residual_block_forward.2} parent=77 // pred_check_branch
              %784 = sbr.rel (0) target = $region82
            $region81: #{residual_block_forward.2} parent=77 // pred_region
              // Predicated region
              $region94: #{residual_block_forward.2} parent=81 // pred_check
                _
              $region95: #{residual_block_forward.2} parent=81 // pred_check_branch
                %806 = sbr.rel (0) target = $region97
              $region96: #{residual_block_forward.2} parent=81 // pred_region
                loop: start=0, step=1, limit=1
                $region98: #{residual_block_forward.2} parent=96 // loop_pre_header
                  _
                $region99: #{residual_block_forward.2} parent=96 // loop_header
                  %s808 = sphi 0, %s812
                  %p809 = scmp.ge.s32.totalorder %s808, 1
                  %s813 = sphi %s774, %s774
                  %s814 = sphi %s780, %s780
                $region100: #{residual_block_forward.2} parent=96 // loop_header_branch
                  %811 = sbr.rel (%p809) target = $region104
                $region101: #{residual_block_forward.2} parent=96 // loop_body
                  %v815 = vld [vmem:[%s813] sm:$0xff]
                  %816 = vst [vmem:[%s814] sm:$0xff] %v815
                  %v817 = vld [vmem:[%s813 + $0x8] sm:$0xff]
                  %818 = vst [vmem:[%s814 + $0x10] sm:$0xff] %v817
                  %v819 = vld [vmem:[%s813 + $0x10] sm:$0xff]
                  %820 = vst [vmem:[%s814 + $0x20] sm:$0xff] %v819
                  %v821 = vld [vmem:[%s813 + $0x18] sm:$0xff]
                  %822 = vst [vmem:[%s814 + $0x30] sm:$0xff] %v821
                $region102: #{residual_block_forward.2} parent=96 // loop_footer
                  %s812 = sadd.s32 1, %s808
                $region103: #{residual_block_forward.2} parent=96 // loop_footer_branch
                  %807 = sbr.rel target = $region99
                $region104: #{residual_block_forward.2} parent=96 // loop_exit
                  _
              $region97: #{residual_block_forward.2} parent=81 // pred_fallthru
                _
              // Predicated region
              $region105: #{residual_block_forward.2} parent=81 // pred_check
                _
              $region106: #{residual_block_forward.2} parent=81 // pred_check_branch
                %824 = sbr.rel target = $region108
              $region107: #{residual_block_forward.2} parent=81 // pred_region
                _
              $region108: #{residual_block_forward.2} parent=81 // pred_fallthru
                _
            $region82: #{residual_block_forward.2} parent=77 // pred_fallthru
              _
            // Predicated region
            $region83: #{residual_block_forward.2} parent=77 // pred_check
              _
            $region84: #{residual_block_forward.2} parent=77 // pred_check_branch
              %786 = sbr.rel target = $region86
            $region85: #{residual_block_forward.2} parent=77 // pred_region
              %s788 = ssub.s32 256, 1
              loop: start=0, step=1, limit=1
              $region87: #{residual_block_forward.2} parent=85 // loop_pre_header
                _
              $region88: #{residual_block_forward.2} parent=85 // loop_header
                %s790 = sphi 0, %s794
                %p791 = scmp.ge.s32.totalorder %s790, 1
                %s795 = sphi %s774, %s774
                %s796 = sphi %s780, %s780
              $region89: #{residual_block_forward.2} parent=85 // loop_header_branch
                %793 = sbr.rel (%p791) target = $region93
              $region90: #{residual_block_forward.2} parent=85 // loop_body
                %v797 = vld [vmem:[%s795] sm:%s788]
                %798 = vst [vmem:[%s796] sm:%s788] %v797
                %v799 = vld [vmem:[%s795 + $0x8] sm:%s788]
                %800 = vst [vmem:[%s796 + $0x10] sm:%s788] %v799
                %v801 = vld [vmem:[%s795 + $0x10] sm:%s788]
                %802 = vst [vmem:[%s796 + $0x20] sm:%s788] %v801
                %v803 = vld [vmem:[%s795 + $0x18] sm:%s788]
                %804 = vst [vmem:[%s796 + $0x30] sm:%s788] %v803
              $region91: #{residual_block_forward.2} parent=85 // loop_footer
                %s794 = sadd.s32 1, %s790
              $region92: #{residual_block_forward.2} parent=85 // loop_footer_branch
                %789 = sbr.rel target = $region88
              $region93: #{residual_block_forward.2} parent=85 // loop_exit
                _
            $region86: #{residual_block_forward.2} parent=77 // pred_fallthru
              _
          $region78: #{residual_block_forward.2} parent=73 // pred_fallthru
            _
          %825 = vnop
        $region74: #{residual_block_forward.2} parent=65 // pred_fallthru
          _
      $region66: #{residual_block_forward.2} parent=5 // pred_fallthru
        _
      %p826 = scmp.le.s32.totalorder 2, %s9
      // Predicated region
      $region109: #{residual_block_forward.2} parent=5 // pred_check
        %p827 = pneg %p826
      $region110: #{residual_block_forward.2} parent=5 // pred_check_branch
        %829 = sbr.rel (%p827) target = $region112
      $region111: #{residual_block_forward.2} parent=5 // pred_region
        %s830 = ssub.s32 %s9, 2
        // Predicated region
        $region113: #{residual_block_forward.2} parent=111 // pred_check
          %p831 = pneg %p106
        $region114: #{residual_block_forward.2} parent=111 // pred_check_branch
          %833 = sbr.rel (%p831) target = $region116
        $region115: #{residual_block_forward.2} parent=111 // pred_region
          %s834 = sand.u32 %s91, 1
          %s835 = sand.u32 %s91, 1
          %s836 = smul.addr %s835, 32
          %s837 = scalar_lea.vmem [#allocation3], %s836
        $region116: #{residual_block_forward.2} parent=111 // pred_fallthru
          _
      $region112: #{residual_block_forward.2} parent=5 // pred_fallthru
        _
    $region6: #{residual_block_forward.2} parent=1 // loop_footer
      %s13 = sadd.s32 1, %s9
    $region7: #{residual_block_forward.2} parent=1 // loop_footer_branch
      %8 = sbr.rel target = $region3
    $region8: #{residual_block_forward.2} parent=1 // loop_exit
      _

// kernel: residual_block_forward.3
$region0: #{residual_block_forward.3}
  #allocation0 [shape = 'u32[]', space=smem, size = 0x4, offset = 0x4, fixed_abs, tag = 'smem constant byte address 0x4 - core index']
  #allocation1 [shape = 'u32[144,128]{1,0:T(1,128)}', space=vmem, size = 0x12000, scoped, tag = 'internal scratch']
  %s0 = inlined_call_operand.vmem [shape: bf16[32,288], index: 0, kind: input, shape index: {}]
  %s1 = inlined_call_operand.vmem [shape: bf16[288,512], index: 1, kind: input, shape index: {}]
  %s2 = inlined_call_operand.vmem [shape: f32[32,1], index: 2, kind: input, shape index: {}]
  %s3 = inlined_call_operand.vmem [shape: bf16[32,512], index: 3, kind: input, shape index: {}]
  %s4 = inlined_call_operand.vmem [shape: bf16[32,512], index: 4, kind: output, shape index: {}]
  %s5 = sld [smem:[#allocation0]]
  $region159: #{residual_block_forward.3} parent=0
    _
  %s7 = ssub.s32 1, %s5
  %s8 = scalar_select 0, %s7, %s5
  $region1: #{residual_block_forward.3} parent=0
    #allocation2 [shape = 'u8[294912]{0}', space=vmem, size = 0x48000, scoped, tag = 'input window, operand 1']
    #allocation3 [shape = 'u8[32768]{0}', space=vmem, size = 0x8000, scoped, tag = 'input window, operand 3']
    #allocation4 [shape = 'u8[32768]{0}', space=vmem, size = 0x8000, scoped, tag = 'output window, operand 0']
    loop: start=0, step=1, limit=4
    $region2: #{residual_block_forward.3} parent=1 // loop_pre_header
      _
    $region3: #{residual_block_forward.3} parent=1 // loop_header
      %s10 = sphi 0, %s14
      %p11 = scmp.ge.s32.totalorder %s10, 4
      %s18 = sphi 0, %s18
      %s20 = sphi 0, %s18
      %s21 = sphi 0, %s20
      %s35 = sphi 0, %s21
      %s41 = sphi 0, %s43
      %s44 = sphi 0, %s41
      %s45 = sphi 0, %s44
      %s61 = sphi 0, %s45
      %s65 = sphi 0, %s65
      %s67 = sphi 0, %s65
      %s68 = sphi 0, %s67
      %s82 = sphi 0, %s68
      %s88 = sphi 0, %s90
      %s91 = sphi 0, %s88
      %s92 = sphi 0, %s91
      %s108 = sphi 0, %s92
      %s114 = sphi 0, %s116
      %s117 = sphi 0, %s114
      %s118 = sphi 0, %s117
      %s134 = sphi 0, %s118
    $region4: #{residual_block_forward.3} parent=1 // loop_header_branch
      %13 = sbr.rel (%p11) target = $region8
    $region5: #{residual_block_forward.3} parent=1 // loop_body
      %s15 = ssub.s32 %s10, 1
      %s16 = ssub.s32 %s10, 2
      %s17 = sadd.s32 %s10, 1
      %s19 = sadd.s32 %s18, 1
      %p22 = scmp.eq.s32.totalorder %s10, 1
      %p23 = scmp.ne.s32.totalorder %s18, %s20
      %p24 = scmp.eq.s32.totalorder %s10, 0
      %p25 = por %p23, %p24
      %p26 = scmp.ne.s32.totalorder %s18, %s20
      %p27 = scmp.eq.s32.totalorder %s15, 1
      %p28 = por %p26, %p27
      %p29 = scmp.ne.s32.totalorder %s20, %s21
      %p30 = scmp.eq.s32.totalorder %s15, 0
      %p31 = por %p29, %p30
      %p32 = scmp.ne.s32.totalorder %s20, %s21
      %p33 = scmp.eq.s32.totalorder %s16, 1
      %p34 = por %p32, %p33
      %p36 = scmp.ne.s32.totalorder %s21, %s35
      %p37 = scmp.eq.s32.totalorder %s16, 0
      %p38 = por %p36, %p37
      %s39 = ssub.s32 %s10, %s17
      %p40 = scmp.eq.s32.totalorder %s39, 0
      %s42 = sadd.s32 %s41, 1
      %s43 = scalar_select %p40, %s41, %s42
      %p46 = pneg %p40
      %p47 = scmp.eq.s32.totalorder %s10, 1
      %p48 = por %p46, %p47
      %p49 = scmp.ne.s32.totalorder %s41, %s44
      %p50 = scmp.eq.s32.totalorder %s10, 0
      %p51 = por %p49, %p50
      %p52 = scmp.ne.s32.totalorder %s41, %s44
      %p53 = scmp.eq.s32.totalorder %s15, 1
      %p54 = por %p52, %p53
      %p55 = scmp.ne.s32.totalorder %s44, %s45
      %p56 = scmp.eq.s32.totalorder %s15, 0
      %p57 = por %p55, %p56
      %p58 = scmp.ne.s32.totalorder %s44, %s45
      %p59 = scmp.eq.s32.totalorder %s16, 1
      %p60 = por %p58, %p59
      %p62 = scmp.ne.s32.totalorder %s45, %s61
      %p63 = scmp.eq.s32.totalorder %s16, 0
      %p64 = por %p62, %p63
      %s66 = sadd.s32 %s65, 1
      %p69 = scmp.eq.s32.totalorder %s10, 1
      %p70 = scmp.ne.s32.totalorder %s65, %s67
      %p71 = scmp.eq.s32.totalorder %s10, 0
      %p72 = por %p70, %p71
      %p73 = scmp.ne.s32.totalorder %s65, %s67
      %p74 = scmp.eq.s32.totalorder %s15, 1
      %p75 = por %p73, %p74
      %p76 = scmp.ne.s32.totalorder %s67, %s68
      %p77 = scmp.eq.s32.totalorder %s15, 0
      %p78 = por %p76, %p77
      %p79 = scmp.ne.s32.totalorder %s67, %s68
      %p80 = scmp.eq.s32.totalorder %s16, 1
      %p81 = por %p79, %p80
      %p83 = scmp.ne.s32.totalorder %s68, %s82
      %p84 = scmp.eq.s32.totalorder %s16, 0
      %p85 = por %p83, %p84
      %s86 = ssub.s32 %s10, %s17
      %p87 = scmp.eq.s32.totalorder %s86, 0
      %s89 = sadd.s32 %s88, 1
      %s90 = scalar_select %p87, %s88, %s89
      %p93 = pneg %p87
      %p94 = scmp.eq.s32.totalorder %s10, 1
      %p95 = por %p93, %p94
      %p96 = scmp.ne.s32.totalorder %s88, %s91
      %p97 = scmp.eq.s32.totalorder %s10, 0
      %p98 = por %p96, %p97
      %p99 = scmp.ne.s32.totalorder %s88, %s91
      %p100 = scmp.eq.s32.totalorder %s15, 1
      %p101 = por %p99, %p100
      %p102 = scmp.ne.s32.totalorder %s91, %s92
      %p103 = scmp.eq.s32.totalorder %s15, 0
      %p104 = por %p102, %p103
      %p105 = scmp.ne.s32.totalorder %s91, %s92
      %p106 = scmp.eq.s32.totalorder %s16, 1
      %p107 = por %p105, %p106
      %p109 = scmp.ne.s32.totalorder %s92, %s108
      %p110 = scmp.eq.s32.totalorder %s16, 0
      %p111 = por %p109, %p110
      %s112 = ssub.s32 %s10, %s17
      %p113 = scmp.eq.s32.totalorder %s112, 0
      %s115 = sadd.s32 %s114, 1
      %s116 = scalar_select %p113, %s114, %s115
      %p119 = pneg %p113
      %p120 = scmp.eq.s32.totalorder %s10, 1
      %p121 = por %p119, %p120
      %p122 = scmp.ne.s32.totalorder %s114, %s117
      %p123 = scmp.eq.s32.totalorder %s10, 0
      %p124 = por %p122, %p123
      %p125 = scmp.ne.s32.totalorder %s114, %s117
      %p126 = scmp.eq.s32.totalorder %s15, 1
      %p127 = por %p125, %p126
      %p128 = scmp.ne.s32.totalorder %s117, %s118
      %p129 = scmp.eq.s32.totalorder %s15, 0
      %p130 = por %p128, %p129
      %p131 = scmp.ne.s32.totalorder %s117, %s118
      %p132 = scmp.eq.s32.totalorder %s16, 1
      %p133 = por %p131, %p132
      %p135 = scmp.ne.s32.totalorder %s118, %s134
      %p136 = scmp.eq.s32.totalorder %s16, 0
      %p137 = por %p135, %p136
      %p138 = scmp.le.s32.totalorder 1, %s10
      %p139 = scmp.lt.s32.totalorder %s10, 3
      %p140 = pnand %p138, %p139
      %p141 = pneg %p140
      // Predicated region
      $region9: #{residual_block_forward.3} parent=5 // pred_check
        _
      $region10: #{residual_block_forward.3} parent=5 // pred_check_branch
        %143 = sbr.rel (%p140) target = $region12
      $region11: #{residual_block_forward.3} parent=5 // pred_region
        %s144 = ssub.s32 %s10, 1
        // Predicated region
        $region13: #{residual_block_forward.3} parent=11 // pred_check
          %p145 = pneg %p31
        $region14: #{residual_block_forward.3} parent=11 // pred_check_branch
          %147 = sbr.rel (%p145) target = $region16
        $region15: #{residual_block_forward.3} parent=11 // pred_region
          _
        $region16: #{residual_block_forward.3} parent=11 // pred_fallthru
          _
        // Predicated region
        $region17: #{residual_block_forward.3} parent=11 // pred_check
          %p148 = pneg %p78
        $region18: #{residual_block_forward.3} parent=11 // pred_check_branch
          %150 = sbr.rel (%p148) target = $region20
        $region19: #{residual_block_forward.3} parent=11 // pred_region
          _
        $region20: #{residual_block_forward.3} parent=11 // pred_fallthru
          _
      $region12: #{residual_block_forward.3} parent=5 // pred_fallthru
        _
      %p151 = scmp.lt.s32.totalorder %s10, 2
      // Predicated region
      $region21: #{residual_block_forward.3} parent=5 // pred_check
        %p152 = pneg %p151
      $region22: #{residual_block_forward.3} parent=5 // pred_check_branch
        %154 = sbr.rel (%p152) target = $region24
      $region23: #{residual_block_forward.3} parent=5 // pred_region
        // Predicated region
        $region25: #{residual_block_forward.3} parent=23 // pred_check
          %p155 = pneg %p51
        $region26: #{residual_block_forward.3} parent=23 // pred_check_branch
          %157 = sbr.rel (%p155) target = $region28
        $region27: #{residual_block_forward.3} parent=23 // pred_region
          %s158 = sand.u32 %s41, 1
          %s159 = sand.u32 %s41, 1
          %s160 = smul.addr %s159, 288
          %s161 = scalar_lea.vmem [#allocation2], %s160
          %s162 = smul.u32 2, %s10
          %s163 = smul.addr %s162, 4
          %s164 = scalar_lea.vmem %s1, %s163
          // Predicated region
          $region29: #{residual_block_forward.3} parent=27 // pred_check
            _
          $region30: #{residual_block_forward.3} parent=27 // pred_check_branch
            %166 = sbr.rel (0) target = $region32
          $region31: #{residual_block_forward.3} parent=27 // pred_region
            // Predicated region
            $region33: #{residual_block_forward.3} parent=31 // pred_check
              _
            $region34: #{residual_block_forward.3} parent=31 // pred_check_branch
              %168 = sbr.rel (0) target = $region36
            $region35: #{residual_block_forward.3} parent=31 // pred_region
              // Predicated region
              $region48: #{residual_block_forward.3} parent=35 // pred_check
                _
              $region49: #{residual_block_forward.3} parent=35 // pred_check_branch
                %254 = sbr.rel (0) target = $region51
              $region50: #{residual_block_forward.3} parent=35 // pred_region
                loop: start=0, step=1, limit=1
                $region52: #{residual_block_forward.3} parent=50 // loop_pre_header
                  _
                $region53: #{residual_block_forward.3} parent=50 // loop_header
                  %s256 = sphi 0, %s260
                  %p257 = scmp.ge.s32.totalorder %s256, 1
                  %s261 = sphi %s164, %s164
                  %s262 = sphi %s161, %s161
                $region54: #{residual_block_forward.3} parent=50 // loop_header_branch
                  %259 = sbr.rel (%p257) target = $region58
                $region55: #{residual_block_forward.3} parent=50 // loop_body
                  %v263 = vld [vmem:[%s261] sm:$0xff]
                  %264 = vst [vmem:[%s262] sm:$0xff] %v263
                  %v265 = vld [vmem:[%s261 + $0x10] sm:$0xff]
                  %266 = vst [vmem:[%s262 + $0x8] sm:$0xff] %v265
                  %v267 = vld [vmem:[%s261 + $0x20] sm:$0xff]
                  %268 = vst [vmem:[%s262 + $0x10] sm:$0xff] %v267
                  %v269 = vld [vmem:[%s261 + $0x30] sm:$0xff]
                  %270 = vst [vmem:[%s262 + $0x18] sm:$0xff] %v269
                  %v271 = vld [vmem:[%s261 + $0x40] sm:$0xff]
                  %272 = vst [vmem:[%s262 + $0x20] sm:$0xff] %v271
                  %v273 = vld [vmem:[%s261 + $0x50] sm:$0xff]
                  %274 = vst [vmem:[%s262 + $0x28] sm:$0xff] %v273
                  %v275 = vld [vmem:[%s261 + $0x60] sm:$0xff]
                  %276 = vst [vmem:[%s262 + $0x30] sm:$0xff] %v275
                  %v277 = vld [vmem:[%s261 + $0x70] sm:$0xff]
                  %278 = vst [vmem:[%s262 + $0x38] sm:$0xff] %v277
                  %v279 = vld [vmem:[%s261 + $0x80] sm:$0xff]
                  %280 = vst [vmem:[%s262 + $0x40] sm:$0xff] %v279
                  %v281 = vld [vmem:[%s261 + $0x90] sm:$0xff]
                  %282 = vst [vmem:[%s262 + $0x48] sm:$0xff] %v281
                  %v283 = vld [vmem:[%s261 + $0xa0] sm:$0xff]
                  %284 = vst [vmem:[%s262 + $0x50] sm:$0xff] %v283
                  %v285 = vld [vmem:[%s261 + $0xb0] sm:$0xff]
                  %286 = vst [vmem:[%s262 + $0x58] sm:$0xff] %v285
                  %v287 = vld [vmem:[%s261 + $0xc0] sm:$0xff]
                  %288 = vst [vmem:[%s262 + $0x60] sm:$0xff] %v287
                  %v289 = vld [vmem:[%s261 + $0xd0] sm:$0xff]
                  %290 = vst [vmem:[%s262 + $0x68] sm:$0xff] %v289
                  %v291 = vld [vmem:[%s261 + $0xe0] sm:$0xff]
                  %292 = vst [vmem:[%s262 + $0x70] sm:$0xff] %v291
                  %v293 = vld [vmem:[%s261 + $0xf0] sm:$0xff]
                  %294 = vst [vmem:[%s262 + $0x78] sm:$0xff] %v293
                  %v295 = vld [vmem:[%s261 + $0x100] sm:$0xff]
                  %296 = vst [vmem:[%s262 + $0x80] sm:$0xff] %v295
                  %v297 = vld [vmem:[%s261 + $0x110] sm:$0xff]
                  %298 = vst [vmem:[%s262 + $0x88] sm:$0xff] %v297
                  %v299 = vld [vmem:[%s261 + $0x120] sm:$0xff]
                  %300 = vst [vmem:[%s262 + $0x90] sm:$0xff] %v299
                  %v301 = vld [vmem:[%s261 + $0x130] sm:$0xff]
                  %302 = vst [vmem:[%s262 + $0x98] sm:$0xff] %v301
                  %v303 = vld [vmem:[%s261 + $0x140] sm:$0xff]
                  %304 = vst [vmem:[%s262 + $0xa0] sm:$0xff] %v303
                  %v305 = vld [vmem:[%s261 + $0x150] sm:$0xff]
                  %306 = vst [vmem:[%s262 + $0xa8] sm:$0xff] %v305
                  %v307 = vld [vmem:[%s261 + $0x160] sm:$0xff]
                  %308 = vst [vmem:[%s262 + $0xb0] sm:$0xff] %v307
                  %v309 = vld [vmem:[%s261 + $0x170] sm:$0xff]
                  %310 = vst [vmem:[%s262 + $0xb8] sm:$0xff] %v309
                  %v311 = vld [vmem:[%s261 + $0x180] sm:$0xff]
                  %312 = vst [vmem:[%s262 + $0xc0] sm:$0xff] %v311
                  %v313 = vld [vmem:[%s261 + $0x190] sm:$0xff]
                  %314 = vst [vmem:[%s262 + $0xc8] sm:$0xff] %v313
                  %v315 = vld [vmem:[%s261 + $0x1a0] sm:$0xff]
                  %316 = vst [vmem:[%s262 + $0xd0] sm:$0xff] %v315
                  %v317 = vld [vmem:[%s261 + $0x1b0] sm:$0xff]
                  %318 = vst [vmem:[%s262 + $0xd8] sm:$0xff] %v317
                  %v319 = vld [vmem:[%s261 + $0x1c0] sm:$0xff]
                  %320 = vst [vmem:[%s262 + $0xe0] sm:$0xff] %v319
                  %v321 = vld [vmem:[%s261 + $0x1d0] sm:$0xff]
                  %322 = vst [vmem:[%s262 + $0xe8] sm:$0xff] %v321
                  %v323 = vld [vmem:[%s261 + $0x1e0] sm:$0xff]
                  %324 = vst [vmem:[%s262 + $0xf0] sm:$0xff] %v323
                  %v325 = vld [vmem:[%s261 + $0x1f0] sm:$0xff]
                  %326 = vst [vmem:[%s262 + $0xf8] sm:$0xff] %v325
                  %v327 = vld [vmem:[%s261 + $0x200] sm:$0xff]
                  %328 = vst [vmem:[%s262 + $0x100] sm:$0xff] %v327
                  %v329 = vld [vmem:[%s261 + $0x210] sm:$0xff]
                  %330 = vst [vmem:[%s262 + $0x108] sm:$0xff] %v329
                  %v331 = vld [vmem:[%s261 + $0x220] sm:$0xff]
                  %332 = vst [vmem:[%s262 + $0x110] sm:$0xff] %v331
                  %v333 = vld [vmem:[%s261 + $0x230] sm:$0xff]
                  %334 = vst [vmem:[%s262 + $0x118] sm:$0xff] %v333
                $region56: #{residual_block_forward.3} parent=50 // loop_footer
                  %s260 = sadd.s32 1, %s256
                $region57: #{residual_block_forward.3} parent=50 // loop_footer_branch
                  %255 = sbr.rel target = $region53
                $region58: #{residual_block_forward.3} parent=50 // loop_exit
                  _
              $region51: #{residual_block_forward.3} parent=35 // pred_fallthru
                _
              // Predicated region
              $region59: #{residual_block_forward.3} parent=35 // pred_check
                _
              $region60: #{residual_block_forward.3} parent=35 // pred_check_branch
                %336 = sbr.rel target = $region62
              $region61: #{residual_block_forward.3} parent=35 // pred_region
                _
              $region62: #{residual_block_forward.3} parent=35 // pred_fallthru
                _
            $region36: #{residual_block_forward.3} parent=31 // pred_fallthru
              _
            // Predicated region
            $region37: #{residual_block_forward.3} parent=31 // pred_check
              _
            $region38: #{residual_block_forward.3} parent=31 // pred_check_branch
              %170 = sbr.rel target = $region40
            $region39: #{residual_block_forward.3} parent=31 // pred_region
              %s172 = ssub.s32 256, 1
              loop: start=0, step=1, limit=1
              $region41: #{residual_block_forward.3} parent=39 // loop_pre_header
                _
              $region42: #{residual_block_forward.3} parent=39 // loop_header
                %s174 = sphi 0, %s178
                %p175 = scmp.ge.s32.totalorder %s174, 1
                %s179 = sphi %s164, %s164
                %s180 = sphi %s161, %s161
              $region43: #{residual_block_forward.3} parent=39 // loop_header_branch
                %177 = sbr.rel (%p175) target = $region47
              $region44: #{residual_block_forward.3} parent=39 // loop_body
                %v181 = vld [vmem:[%s179] sm:%s172]
                %182 = vst [vmem:[%s180] sm:%s172] %v181
                %v183 = vld [vmem:[%s179 + $0x10] sm:%s172]
                %184 = vst [vmem:[%s180 + $0x8] sm:%s172] %v183
                %v185 = vld [vmem:[%s179 + $0x20] sm:%s172]
                %186 = vst [vmem:[%s180 + $0x10] sm:%s172] %v185
                %v187 = vld [vmem:[%s179 + $0x30] sm:%s172]
                %188 = vst [vmem:[%s180 + $0x18] sm:%s172] %v187
                %v189 = vld [vmem:[%s179 + $0x40] sm:%s172]
                %190 = vst [vmem:[%s180 + $0x20] sm:%s172] %v189
                %v191 = vld [vmem:[%s179 + $0x50] sm:%s172]
                %192 = vst [vmem:[%s180 + $0x28] sm:%s172] %v191
                %v193 = vld [vmem:[%s179 + $0x60] sm:%s172]
                %194 = vst [vmem:[%s180 + $0x30] sm:%s172] %v193
                %v195 = vld [vmem:[%s179 + $0x70] sm:%s172]
                %196 = vst [vmem:[%s180 + $0x38] sm:%s172] %v195
                %v197 = vld [vmem:[%s179 + $0x80] sm:%s172]
                %198 = vst [vmem:[%s180 + $0x40] sm:%s172] %v197
                %v199 = vld [vmem:[%s179 + $0x90] sm:%s172]
                %200 = vst [vmem:[%s180 + $0x48] sm:%s172] %v199
                %v201 = vld [vmem:[%s179 + $0xa0] sm:%s172]
                %202 = vst [vmem:[%s180 + $0x50] sm:%s172] %v201
                %v203 = vld [vmem:[%s179 + $0xb0] sm:%s172]
                %204 = vst [vmem:[%s180 + $0x58] sm:%s172] %v203
                %v205 = vld [vmem:[%s179 + $0xc0] sm:%s172]
                %206 = vst [vmem:[%s180 + $0x60] sm:%s172] %v205
                %v207 = vld [vmem:[%s179 + $0xd0] sm:%s172]
                %208 = vst [vmem:[%s180 + $0x68] sm:%s172] %v207
                %v209 = vld [vmem:[%s179 + $0xe0] sm:%s172]
                %210 = vst [vmem:[%s180 + $0x70] sm:%s172] %v209
                %v211 = vld [vmem:[%s179 + $0xf0] sm:%s172]
                %212 = vst [vmem:[%s180 + $0x78] sm:%s172] %v211
                %v213 = vld [vmem:[%s179 + $0x100] sm:%s172]
                %214 = vst [vmem:[%s180 + $0x80] sm:%s172] %v213
                %v215 = vld [vmem:[%s179 + $0x110] sm:%s172]
                %216 = vst [vmem:[%s180 + $0x88] sm:%s172] %v215
                %v217 = vld [vmem:[%s179 + $0x120] sm:%s172]
                %218 = vst [vmem:[%s180 + $0x90] sm:%s172] %v217
                %v219 = vld [vmem:[%s179 + $0x130] sm:%s172]
                %220 = vst [vmem:[%s180 + $0x98] sm:%s172] %v219
                %v221 = vld [vmem:[%s179 + $0x140] sm:%s172]
                %222 = vst [vmem:[%s180 + $0xa0] sm:%s172] %v221
                %v223 = vld [vmem:[%s179 + $0x150] sm:%s172]
                %224 = vst [vmem:[%s180 + $0xa8] sm:%s172] %v223
                %v225 = vld [vmem:[%s179 + $0x160] sm:%s172]
                %226 = vst [vmem:[%s180 + $0xb0] sm:%s172] %v225
                %v227 = vld [vmem:[%s179 + $0x170] sm:%s172]
                %228 = vst [vmem:[%s180 + $0xb8] sm:%s172] %v227
                %v229 = vld [vmem:[%s179 + $0x180] sm:%s172]
                %230 = vst [vmem:[%s180 + $0xc0] sm:%s172] %v229
                %v231 = vld [vmem:[%s179 + $0x190] sm:%s172]
                %232 = vst [vmem:[%s180 + $0xc8] sm:%s172] %v231
                %v233 = vld [vmem:[%s179 + $0x1a0] sm:%s172]
                %234 = vst [vmem:[%s180 + $0xd0] sm:%s172] %v233
                %v235 = vld [vmem:[%s179 + $0x1b0] sm:%s172]
                %236 = vst [vmem:[%s180 + $0xd8] sm:%s172] %v235
                %v237 = vld [vmem:[%s179 + $0x1c0] sm:%s172]
                %238 = vst [vmem:[%s180 + $0xe0] sm:%s172] %v237
                %v239 = vld [vmem:[%s179 + $0x1d0] sm:%s172]
                %240 = vst [vmem:[%s180 + $0xe8] sm:%s172] %v239
                %v241 = vld [vmem:[%s179 + $0x1e0] sm:%s172]
                %242 = vst [vmem:[%s180 + $0xf0] sm:%s172] %v241
                %v243 = vld [vmem:[%s179 + $0x1f0] sm:%s172]
                %244 = vst [vmem:[%s180 + $0xf8] sm:%s172] %v243
                %v245 = vld [vmem:[%s179 + $0x200] sm:%s172]
                %246 = vst [vmem:[%s180 + $0x100] sm:%s172] %v245
                %v247 = vld [vmem:[%s179 + $0x210] sm:%s172]
                %248 = vst [vmem:[%s180 + $0x108] sm:%s172] %v247
                %v249 = vld [vmem:[%s179 + $0x220] sm:%s172]
                %250 = vst [vmem:[%s180 + $0x110] sm:%s172] %v249
                %v251 = vld [vmem:[%s179 + $0x230] sm:%s172]
                %252 = vst [vmem:[%s180 + $0x118] sm:%s172] %v251
              $region45: #{residual_block_forward.3} parent=39 // loop_footer
                %s178 = sadd.s32 1, %s174
              $region46: #{residual_block_forward.3} parent=39 // loop_footer_branch
                %173 = sbr.rel target = $region42
              $region47: #{residual_block_forward.3} parent=39 // loop_exit
                _
            $region40: #{residual_block_forward.3} parent=31 // pred_fallthru
              _
          $region32: #{residual_block_forward.3} parent=27 // pred_fallthru
            _
          %337 = vnop
        $region28: #{residual_block_forward.3} parent=23 // pred_fallthru
          _
        // Predicated region
        $region63: #{residual_block_forward.3} parent=23 // pred_check
          %p338 = pneg %p98
        $region64: #{residual_block_forward.3} parent=23 // pred_check_branch
          %340 = sbr.rel (%p338) target = $region66
        $region65: #{residual_block_forward.3} parent=23 // pred_region
          %s341 = sand.u32 %s88, 1
          %s342 = sand.u32 %s88, 1
          %s343 = smul.addr %s342, 32
          %s344 = scalar_lea.vmem [#allocation3], %s343
          %s345 = smul.u32 2, %s10
          %s346 = smul.addr %s345, 4
          %s347 = scalar_lea.vmem %s3, %s346
          // Predicated region
          $region67: #{residual_block_forward.3} parent=65 // pred_check
            _
          $region68: #{residual_block_forward.3} parent=65 // pred_check_branch
            %349 = sbr.rel (0) target = $region70
          $region69: #{residual_block_forward.3} parent=65 // pred_region
            // Predicated region
            $region71: #{residual_block_forward.3} parent=69 // pred_check
              _
            $region72: #{residual_block_forward.3} parent=69 // pred_check_branch
              %351 = sbr.rel (0) target = $region74
            $region73: #{residual_block_forward.3} parent=69 // pred_region
              // Predicated region
              $region86: #{residual_block_forward.3} parent=73 // pred_check
                _
              $region87: #{residual_block_forward.3} parent=73 // pred_check_branch
                %373 = sbr.rel (0) target = $region89
              $region88: #{residual_block_forward.3} parent=73 // pred_region
                loop: start=0, step=1, limit=1
                $region90: #{residual_block_forward.3} parent=88 // loop_pre_header
                  _
                $region91: #{residual_block_forward.3} parent=88 // loop_header
                  %s375 = sphi 0, %s379
                  %p376 = scmp.ge.s32.totalorder %s375, 1
                  %s380 = sphi %s347, %s347
                  %s381 = sphi %s344, %s344
                $region92: #{residual_block_forward.3} parent=88 // loop_header_branch
                  %378 = sbr.rel (%p376) target = $region96
                $region93: #{residual_block_forward.3} parent=88 // loop_body
                  %v382 = vld [vmem:[%s380] sm:$0xff]
                  %383 = vst [vmem:[%s381] sm:$0xff] %v382
                  %v384 = vld [vmem:[%s380 + $0x10] sm:$0xff]
                  %385 = vst [vmem:[%s381 + $0x8] sm:$0xff] %v384
                  %v386 = vld [vmem:[%s380 + $0x20] sm:$0xff]
                  %387 = vst [vmem:[%s381 + $0x10] sm:$0xff] %v386
                  %v388 = vld [vmem:[%s380 + $0x30] sm:$0xff]
                  %389 = vst [vmem:[%s381 + $0x18] sm:$0xff] %v388
                $region94: #{residual_block_forward.3} parent=88 // loop_footer
                  %s379 = sadd.s32 1, %s375
                $region95: #{residual_block_forward.3} parent=88 // loop_footer_branch
                  %374 = sbr.rel target = $region91
                $region96: #{residual_block_forward.3} parent=88 // loop_exit
                  _
              $region89: #{residual_block_forward.3} parent=73 // pred_fallthru
                _
              // Predicated region
              $region97: #{residual_block_forward.3} parent=73 // pred_check
                _
              $region98: #{residual_block_forward.3} parent=73 // pred_check_branch
                %391 = sbr.rel target = $region100
              $region99: #{residual_block_forward.3} parent=73 // pred_region
                _
              $region100: #{residual_block_forward.3} parent=73 // pred_fallthru
                _
            $region74: #{residual_block_forward.3} parent=69 // pred_fallthru
              _
            // Predicated region
            $region75: #{residual_block_forward.3} parent=69 // pred_check
              _
            $region76: #{residual_block_forward.3} parent=69 // pred_check_branch
              %353 = sbr.rel target = $region78
            $region77: #{residual_block_forward.3} parent=69 // pred_region
              %s355 = ssub.s32 256, 1
              loop: start=0, step=1, limit=1
              $region79: #{residual_block_forward.3} parent=77 // loop_pre_header
                _
              $region80: #{residual_block_forward.3} parent=77 // loop_header
                %s357 = sphi 0, %s361
                %p358 = scmp.ge.s32.totalorder %s357, 1
                %s362 = sphi %s347, %s347
                %s363 = sphi %s344, %s344
              $region81: #{residual_block_forward.3} parent=77 // loop_header_branch
                %360 = sbr.rel (%p358) target = $region85
              $region82: #{residual_block_forward.3} parent=77 // loop_body
                %v364 = vld [vmem:[%s362] sm:%s355]
                %365 = vst [vmem:[%s363] sm:%s355] %v364
                %v366 = vld [vmem:[%s362 + $0x10] sm:%s355]
                %367 = vst [vmem:[%s363 + $0x8] sm:%s355] %v366
                %v368 = vld [vmem:[%s362 + $0x20] sm:%s355]
                %369 = vst [vmem:[%s363 + $0x10] sm:%s355] %v368
                %v370 = vld [vmem:[%s362 + $0x30] sm:%s355]
                %371 = vst [vmem:[%s363 + $0x18] sm:%s355] %v370
              $region83: #{residual_block_forward.3} parent=77 // loop_footer
                %s361 = sadd.s32 1, %s357
              $region84: #{residual_block_forward.3} parent=77 // loop_footer_branch
                %356 = sbr.rel target = $region80
              $region85: #{residual_block_forward.3} parent=77 // loop_exit
                _
            $region78: #{residual_block_forward.3} parent=69 // pred_fallthru
              _
          $region70: #{residual_block_forward.3} parent=65 // pred_fallthru
            _
          %392 = vnop
        $region66: #{residual_block_forward.3} parent=23 // pred_fallthru
          _
      $region24: #{residual_block_forward.3} parent=5 // pred_fallthru
        _
      %p393 = scmp.le.s32.totalorder 1, %s10
      %p394 = scmp.lt.s32.totalorder %s10, 3
      %p395 = pnand %p393, %p394
      %p396 = pneg %p395
      // Predicated region
      $region101: #{residual_block_forward.3} parent=5 // pred_check
        _
      $region102: #{residual_block_forward.3} parent=5 // pred_check_branch
        %398 = sbr.rel (%p395) target = $region104
      $region103: #{residual_block_forward.3} parent=5 // pred_region
        %s399 = ssub.s32 %s10, 1
        %s400 = sand.u32 %s44, 1
        %s401 = sand.u32 %s44, 1
        %s402 = smul.addr %s401, 288
        %s403 = scalar_lea.vmem [#allocation2], %s402
        // Predicated region
        $region105: #{residual_block_forward.3} parent=103 // pred_check
          %p404 = pneg %p57
        $region106: #{residual_block_forward.3} parent=103 // pred_check_branch
          %406 = sbr.rel (%p404) target = $region108
        $region107: #{residual_block_forward.3} parent=103 // pred_region
          _
        $region108: #{residual_block_forward.3} parent=103 // pred_fallthru
          _
        %s407 = sand.u32 %s91, 1
        %s408 = sand.u32 %s91, 1
        %s409 = smul.addr %s408, 32
        %s410 = scalar_lea.vmem [#allocation3], %s409
        // Predicated region
        $region109: #{residual_block_forward.3} parent=103 // pred_check
          %p411 = pneg %p104
        $region110: #{residual_block_forward.3} parent=103 // pred_check_branch
          %413 = sbr.rel (%p411) target = $region112
        $region111: #{residual_block_forward.3} parent=103 // pred_region
          _
        $region112: #{residual_block_forward.3} parent=103 // pred_fallthru
          _
        %p414 = pneg %p31
        %p415 = pneg %p28
        %s416 = sand.u32 %s44, 1
        %s417 = sand.u32 %s44, 1
        %s418 = smul.addr %s417, 288
        %s419 = scalar_lea.vmem [#allocation2], %s418
        %p420 = pneg %p57
        %p421 = pneg %p54
        %p422 = pneg %p78
        %p423 = pneg %p75
        %s424 = sand.u32 %s91, 1
        %s425 = sand.u32 %s91, 1
        %s426 = smul.addr %s425, 32
        %s427 = scalar_lea.vmem [#allocation3], %s426
        %p428 = pneg %p104
        %p429 = pneg %p101
        %p430 = pneg %p130
        %p431 = pneg %p127
        %s432 = sand.u32 %s117, 1
        %s433 = sand.u32 %s117, 1
        %s434 = smul.addr %s433, 32
        %s435 = scalar_lea.vmem [#allocation4], %s434
        %s436 = smul.u32 2, %s15
        %s437 = smul.u32 2, %s15
        %s438 = smul.u32 2, %s15
        %v440 = vld [vmem:[%s0] sm:$0xff]
        %v441 = vld [vmem:[%s0 + $0x8] sm:$0xf]
        %v442 = vld [vmem:[%s0 + $0xc] sm:$0xff]
        %v443 = vld [vmem:[%s0 + $0x14] sm:$0xf]
        %v444 = vld [vmem:[%s0 + $0x18] sm:$0xff]
        %v445 = vld [vmem:[%s0 + $0x20] sm:$0xf]
        %v446 = vld [vmem:[%s0 + $0x24] sm:$0xff]
        %v447 = vld [vmem:[%s0 + $0x2c] sm:$0xf]
        %v448 = vld [vmem:[%s403] sm:$0xff]
        %v449 = vld [vmem:[%s403 + $0x8] sm:$0xff]
        %v450 = vld [vmem:[%s403 + $0x10] sm:$0xff]
        %v451 = vld [vmem:[%s403 + $0x18] sm:$0xff]
        %v452 = vld [vmem:[%s403 + $0x20] sm:$0xff]
        %v453 = vld [vmem:[%s403 + $0x28] sm:$0xff]
        %v454 = vld [vmem:[%s403 + $0x30] sm:$0xff]
        %v455 = vld [vmem:[%s403 + $0x38] sm:$0xff]
        %v456 = vld [vmem:[%s403 + $0x40] sm:$0xff]
        %v457 = vld [vmem:[%s403 + $0x48] sm:$0xff]
        %v458 = vld [vmem:[%s403 + $0x50] sm:$0xff]
        %v459 = vld [vmem:[%s403 + $0x58] sm:$0xff]
        %v460 = vld [vmem:[%s403 + $0x60] sm:$0xff]
        %v461 = vld [vmem:[%s403 + $0x68] sm:$0xff]
        %v462 = vld [vmem:[%s403 + $0x70] sm:$0xff]
        %v463 = vld [vmem:[%s403 + $0x78] sm:$0xff]
        %v464 = vld [vmem:[%s403 + $0x80] sm:$0xff]
        %v465 = vld [vmem:[%s403 + $0x88] sm:$0xff]
        %v466 = vld [vmem:[%s403 + $0x90] sm:$0xff]
        %v467 = vld [vmem:[%s403 + $0x98] sm:$0xff]
        %v468 = vld [vmem:[%s403 + $0xa0] sm:$0xff]
        %v469 = vld [vmem:[%s403 + $0xa8] sm:$0xff]
        %v470 = vld [vmem:[%s403 + $0xb0] sm:$0xff]
        %v471 = vld [vmem:[%s403 + $0xb8] sm:$0xff]
        %v472 = vld [vmem:[%s403 + $0xc0] sm:$0xff]
        %v473 = vld [vmem:[%s403 + $0xc8] sm:$0xff]
        %v474 = vld [vmem:[%s403 + $0xd0] sm:$0xff]
        %v475 = vld [vmem:[%s403 + $0xd8] sm:$0xff]
        %v476 = vld [vmem:[%s403 + $0xe0] sm:$0xff]
        %v477 = vld [vmem:[%s403 + $0xe8] sm:$0xff]
        %v478 = vld [vmem:[%s403 + $0xf0] sm:$0xff]
        %v479 = vld [vmem:[%s403 + $0xf8] sm:$0xff]
        %v480 = vld [vmem:[%s403 + $0x100] sm:$0xff]
        %v481 = vld [vmem:[%s403 + $0x108] sm:$0xff]
        %v482 = vld [vmem:[%s403 + $0x110] sm:$0xff]
        %v483 = vld [vmem:[%s403 + $0x118] sm:$0xff]
        %v484 = vld [vmem:[%s2] sm:$0xff]
        %v485 = vld [vmem:[%s2 + $0x8] sm:$0xff]
        %v486 = vld [vmem:[%s2 + $0x10] sm:$0xff]
        %v487 = vld [vmem:[%s2 + $0x18] sm:$0xff]
        %489 = vset.pattern.permute.xlu0 0
        %490 = vperm.xlu0 %489, %v484
        %v491 = vpop.permute.xlu0 %490
        %494 = vset.pattern.permute.xlu0 0
        %495 = vperm.xlu0 %494, %v485
        %v496 = vpop.permute.xlu0 %495
        %499 = vset.pattern.permute.xlu0 0
        %500 = vperm.xlu0 %499, %v486
        %v501 = vpop.permute.xlu0 %500
        %504 = vset.pattern.permute.xlu0 0
        %505 = vperm.xlu0 %504, %v487
        %v506 = vpop.permute.xlu0 %505
        %v516 = vunpack.c.l.b16 %v440
        %v517 = vunpack.c.h.b16 %v440
        %v518 = vunpack.c.l.b16 %v441
        %v519 = vunpack.c.l.b16 %v442
        %v520 = vunpack.c.h.b16 %v442
        %v521 = vunpack.c.l.b16 %v443
        %v522 = vunpack.c.l.b16 %v444
        %v523 = vunpack.c.h.b16 %v444
        %v524 = vunpack.c.l.b16 %v445
        %v525 = vunpack.c.l.b16 %v446
        %v526 = vunpack.c.h.b16 %v446
        %v527 = vunpack.c.l.b16 %v447
        %v528 = vpack.c.b16 %v519, %v516
        %v529 = vpack.c.b16 %v520, %v517
        %v530 = vpack.c.b16 %v521, %v518
        %v531 = vpack.c.b16 %v525, %v522
        %v532 = vpack.c.b16 %v526, %v523
        %v533 = vpack.c.b16 %v527, %v524
        %v574 = vunpack.c.l.b16 %v448
        %v575 = vunpack.c.h.b16 %v448
        %v576 = vunpack.c.l.b16 %v449
        %v577 = vunpack.c.h.b16 %v449
        %v578 = vunpack.c.l.b16 %v450
        %v579 = vunpack.c.h.b16 %v450
        %v580 = vunpack.c.l.b16 %v451
        %v581 = vunpack.c.h.b16 %v451
        %v582 = vunpack.c.l.b16 %v452
        %v583 = vunpack.c.h.b16 %v452
        %v584 = vunpack.c.l.b16 %v453
        %v585 = vunpack.c.h.b16 %v453
        %v586 = vunpack.c.l.b16 %v454
        %v587 = vunpack.c.h.b16 %v454
        %v588 = vunpack.c.l.b16 %v455
        %v589 = vunpack.c.h.b16 %v455
        %v590 = vunpack.c.l.b16 %v456
        %v591 = vunpack.c.h.b16 %v456
        %v592 = vunpack.c.l.b16 %v457
        %v593 = vunpack.c.h.b16 %v457
        %v594 = vunpack.c.l.b16 %v458
        %v595 = vunpack.c.h.b16 %v458
        %v596 = vunpack.c.l.b16 %v459
        %v597 = vunpack.c.h.b16 %v459
        %v598 = vunpack.c.l.b16 %v460
        %v599 = vunpack.c.h.b16 %v460
        %v600 = vunpack.c.l.b16 %v461
        %v601 = vunpack.c.h.b16 %v461
        %v602 = vunpack.c.l.b16 %v462
        %v603 = vunpack.c.h.b16 %v462
        %v604 = vunpack.c.l.b16 %v463
        %v605 = vunpack.c.h.b16 %v463
        %v606 = vunpack.c.l.b16 %v464
        %v607 = vunpack.c.h.b16 %v464
        %v608 = vunpack.c.l.b16 %v465
        %v609 = vunpack.c.h.b16 %v465
        %v610 = vunpack.c.l.b16 %v466
        %v611 = vunpack.c.h.b16 %v466
        %v612 = vunpack.c.l.b16 %v467
        %v613 = vunpack.c.h.b16 %v467
        %v614 = vunpack.c.l.b16 %v468
        %v615 = vunpack.c.h.b16 %v468
        %v616 = vunpack.c.l.b16 %v469
        %v617 = vunpack.c.h.b16 %v469
        %v618 = vunpack.c.l.b16 %v470
        %v619 = vunpack.c.h.b16 %v470
        %v620 = vunpack.c.l.b16 %v471
        %v621 = vunpack.c.h.b16 %v471
        %v622 = vunpack.c.l.b16 %v472
        %v623 = vunpack.c.h.b16 %v472
        %v624 = vunpack.c.l.b16 %v473
        %v625 = vunpack.c.h.b16 %v473
        %v626 = vunpack.c.l.b16 %v474
        %v627 = vunpack.c.h.b16 %v474
        %v628 = vunpack.c.l.b16 %v475
        %v629 = vunpack.c.h.b16 %v475
        %v630 = vunpack.c.l.b16 %v476
        %v631 = vunpack.c.h.b16 %v476
        %v632 = vunpack.c.l.b16 %v477
        %v633 = vunpack.c.h.b16 %v477
        %v634 = vunpack.c.l.b16 %v478
        %v635 = vunpack.c.h.b16 %v478
        %v636 = vunpack.c.l.b16 %v479
        %v637 = vunpack.c.h.b16 %v479
        %v638 = vunpack.c.l.b16 %v480
        %v639 = vunpack.c.h.b16 %v480
        %v640 = vunpack.c.l.b16 %v481
        %v641 = vunpack.c.h.b16 %v481
        %v642 = vunpack.c.l.b16 %v482
        %v643 = vunpack.c.h.b16 %v482
        %v644 = vunpack.c.l.b16 %v483
        %v645 = vunpack.c.h.b16 %v483
        %v646 = vpack.c.b16 %v576, %v574
        %v647 = vpack.c.b16 %v577, %v575
        %v648 = vpack.c.b16 %v580, %v578
        %v649 = vpack.c.b16 %v581, %v579
        %v650 = vpack.c.b16 %v584, %v582
        %v651 = vpack.c.b16 %v585, %v583
        %v652 = vpack.c.b16 %v588, %v586
        %v653 = vpack.c.b16 %v589, %v587
        %v654 = vpack.c.b16 %v592, %v590
        %v655 = vpack.c.b16 %v593, %v591
        %v656 = vpack.c.b16 %v596, %v594
        %v657 = vpack.c.b16 %v597, %v595
        %v658 = vpack.c.b16 %v600, %v598
        %v659 = vpack.c.b16 %v601, %v599
        %v660 = vpack.c.b16 %v604, %v602
        %v661 = vpack.c.b16 %v605, %v603
        %v662 = vpack.c.b16 %v608, %v606
        %v663 = vpack.c.b16 %v609, %v607
        %v664 = vpack.c.b16 %v612, %v610
        %v665 = vpack.c.b16 %v613, %v611
        %v666 = vpack.c.b16 %v616, %v614
        %v667 = vpack.c.b16 %v617, %v615
        %v668 = vpack.c.b16 %v620, %v618
        %v669 = vpack.c.b16 %v621, %v619
        %v670 = vpack.c.b16 %v624, %v622
        %v671 = vpack.c.b16 %v625, %v623
        %v672 = vpack.c.b16 %v628, %v626
        %v673 = vpack.c.b16 %v629, %v627
        %v674 = vpack.c.b16 %v632, %v630
        %v675 = vpack.c.b16 %v633, %v631
        %v676 = vpack.c.b16 %v636, %v634
        %v677 = vpack.c.b16 %v637, %v635
        %v678 = vpack.c.b16 %v640, %v638
        %v679 = vpack.c.b16 %v641, %v639
        %v680 = vpack.c.b16 %v644, %v642
        %v681 = vpack.c.b16 %v645, %v643
        %vm718 = vcmask 261120
        %v720 = vsel %vm718, %v530, 0
        %v723 = vsel %vm718, %v533, 0
        %725 = vmatprep.subr.bf16.mxu0 %v661
        %726 = vmatpush1.bf16.msra.mxu0 %v660
        %727 = vmatprep.subr.bf16.mxu0 %v659
        %728 = vmatpush1.bf16.msra.mxu0 %v658
        %729 = vmatprep.subr.bf16.mxu0 %v657
        %730 = vmatpush1.bf16.msra.mxu0 %v656
        %731 = vmatprep.subr.bf16.mxu0 %v655
        %732 = vmatpush1.bf16.msra.mxu0 %v654
        %733 = vmatprep.subr.bf16.mxu0 %v653
        %734 = vmatpush1.bf16.msra.mxu0 %v652
        %735 = vmatprep.subr.bf16.mxu0 %v651
        %736 = vmatpush1.bf16.msra.mxu0 %v650
        %737 = vmatprep.subr.bf16.mxu0 %v649
        %738 = vmatpush1.bf16.msra.mxu0 %v648
        %739 = vmatprep.subr.bf16.mxu0 %v647
        %740 = vmatpush1.bf16.msra.mxu0 %v646
        %741 = vmatprep.subr.bf16.mxu0 %v677
        %742 = vmatpush2.bf16.msra.mxu0 %v676
        %743 = vmatprep.subr.bf16.mxu0 %v675
        %744 = vmatpush2.bf16.msra.mxu0 %v674
        %745 = vmatprep.subr.bf16.mxu0 %v673
        %746 = vmatpush2.bf16.msra.mxu0 %v672
        %747 = vmatprep.subr.bf16.mxu0 %v671
        %748 = vmatpush2.bf16.msra.mxu0 %v670
        %749 = vmatprep.subr.bf16.mxu0 %v669
        %750 = vmatpush2.bf16.msra.mxu0 %v668
        %751 = vmatprep.subr.bf16.mxu0 %v667
        %752 = vmatpush2.bf16.msra.mxu0 %v666
        %753 = vmatprep.subr.bf16.mxu0 %v665
        %754 = vmatpush2.bf16.msra.mxu0 %v664
        %755 = vmatprep.subr.bf16.mxu0 %v663
        %756 = vmatpush2.bf16.msra.mxu0 %v662
        %757 = vmatprep.mubr.bf16.mxu0 %v529
        %758 = vmatmul.mubr.bf16.gmra.mxu0 %v528
        %v759 = vpop.f32.mrf.mxu0
        %v760 = vadd.f32 %v491, %v759
        %v761 = vpop.f32.mrf.mxu0
        %v762 = vadd.f32 %v491, %v761
        %v763 = vpop.f32.mrf.mxu0
        %v764 = vadd.f32 %v496, %v763
        %v765 = vpop.f32.mrf.mxu0
        %v766 = vadd.f32 %v496, %v765
        %767 = vmatprep.mubr.bf16.mxu0 %v532
        %768 = vmatmul.mubr.bf16.gmra.mxu0 %v531
        %v769 = vpop.f32.mrf.mxu0
        %v770 = vadd.f32 %v501, %v769
        %v771 = vpop.f32.mrf.mxu0
        %v772 = vadd.f32 %v501, %v771
        %v773 = vpop.f32.mrf.mxu0
        %v774 = vadd.f32 %v506, %v773
        %v775 = vpop.f32.mrf.mxu0
        %v776 = vadd.f32 %v506, %v775
        %777 = vdwg.mxu0
        %778 = vmatprep.subr.bf16.mxu0 0
        %779 = vmatpush1.bf16.msra.mxu0 0
        %780 = vmatprep.subr.bf16.mxu0 0
        %781 = vmatpush1.bf16.msra.mxu0 0
        %782 = vmatprep.subr.bf16.mxu0 0
        %783 = vmatpush1.bf16.msra.mxu0 0
        %784 = vmatprep.subr.bf16.mxu0 0
        %785 = vmatpush1.bf16.msra.mxu0 0
        %786 = vmatprep.subr.bf16.mxu0 0
        %787 = vmatpush1.bf16.msra.mxu0 0
        %788 = vmatprep.subr.bf16.mxu0 0
        %789 = vmatpush1.bf16.msra.mxu0 0
        %790 = vmatprep.subr.bf16.mxu0 %v681
        %791 = vmatpush1.bf16.msra.mxu0 %v680
        %792 = vmatprep.subr.bf16.mxu0 %v679
        %793 = vmatpush1.bf16.msra.mxu0 %v678
        %794 = vmatprep.subr.bf16.mxu0 0
        %795 = vmatpush2.bf16.msra.mxu0 0
        %796 = vmatprep.subr.bf16.mxu0 0
        %797 = vmatpush2.bf16.msra.mxu0 0
        %798 = vmatprep.subr.bf16.mxu0 0
        %799 = vmatpush2.bf16.msra.mxu0 0
        %800 = vmatprep.subr.bf16.mxu0 0
        %801 = vmatpush2.bf16.msra.mxu0 0
        %802 = vmatprep.subr.bf16.mxu0 0
        %803 = vmatpush2.bf16.msra.mxu0 0
        %804 = vmatprep.subr.bf16.mxu0 0
        %805 = vmatpush2.bf16.msra.mxu0 0
        %806 = vmatprep.subr.bf16.mxu0 0
        %807 = vmatpush2.bf16.msra.mxu0 0
        %808 = vmatprep.subr.bf16.mxu0 0
        %809 = vmatpush2.bf16.msra.mxu0 0
        %810 = vmatprep.mubr.bf16.mxu0 0
        %811 = vmatmul.mubr.bf16.gmra.mxu0 %v720
        %v812 = vpop.f32.mrf.mxu0
        %v813 = vadd.f32 %v760, %v812
        %v814 = vpop.f32.mrf.mxu0
        %v815 = vadd.f32 %v762, %v814
        %v816 = vpop.f32.mrf.mxu0
        %v817 = vadd.f32 %v764, %v816
        %v818 = vpop.f32.mrf.mxu0
        %v819 = vadd.f32 %v766, %v818
        %820 = vmatprep.mubr.bf16.mxu0 0
        %821 = vmatmul.mubr.bf16.gmra.mxu0 %v723
        %v822 = vpop.f32.mrf.mxu0
        %v823 = vadd.f32 %v770, %v822
        %v824 = vpop.f32.mrf.mxu0
        %v825 = vadd.f32 %v772, %v824
        %v826 = vpop.f32.mrf.mxu0
        %v827 = vadd.f32 %v774, %v826
        %v828 = vpop.f32.mrf.mxu0
        %v829 = vadd.f32 %v776, %v828
        %830 = vdwg.mxu0
        %v831 = vld [vmem:[%s410] sm:$0xff]
        %v832 = vld [vmem:[%s410 + $0x8] sm:$0xff]
        %v833 = vld [vmem:[%s410 + $0x10] sm:$0xff]
        %v834 = vld [vmem:[%s410 + $0x18] sm:$0xff]
        %v835 = vunpack.c.l.bf16 %v831
        %v836 = vunpack.c.h.bf16 %v831
        %v837 = vunpack.c.l.bf16 %v832
        %v838 = vunpack.c.h.bf16 %v832
        %v839 = vunpack.c.l.bf16 %v833
        %v840 = vunpack.c.h.bf16 %v833
        %v841 = vunpack.c.l.bf16 %v834
        %v842 = vunpack.c.h.bf16 %v834
        %v843 = vadd.f32 %v813, %v835
        %v844 = vadd.f32 %v815, %v836
        %v845 = vadd.f32 %v817, %v837
        %v846 = vadd.f32 %v819, %v838
        %v847 = vadd.f32 %v823, %v839
        %v848 = vadd.f32 %v825, %v840
        %v849 = vadd.f32 %v827, %v841
        %v850 = vadd.f32 %v829, %v842
        %v851 = vpack.c.bf16 %v845, %v843
        %v852 = vpack.c.bf16 %v846, %v844
        %v853 = vpack.c.bf16 %v849, %v847
        %v854 = vpack.c.bf16 %v850, %v848
        %v859 = vunpack.c.l.b16 %v851
        %v860 = vunpack.c.l.b16 %v852
        %v861 = vunpack.c.h.b16 %v851
        %v862 = vunpack.c.h.b16 %v852
        %v863 = vunpack.c.l.b16 %v853
        %v864 = vunpack.c.l.b16 %v854
        %v865 = vunpack.c.h.b16 %v853
        %v866 = vunpack.c.h.b16 %v854
        %v867 = vpack.c.b16 %v860, %v859
        %v868 = vpack.c.b16 %v862, %v861
        %v869 = vpack.c.b16 %v864, %v863
        %v870 = vpack.c.b16 %v866, %v865
        %875 = vst [vmem:[%s435] sm:$0xff] %v867
        %876 = vst [vmem:[%s435 + $0x8] sm:$0xff] %v868
        %877 = vst [vmem:[%s435 + $0x10] sm:$0xff] %v869
        %878 = vst [vmem:[%s435 + $0x18] sm:$0xff] %v870
        %s879 = sand.u32 %s117, 1
        %s880 = sand.u32 %s117, 1
        %s881 = smul.addr %s880, 32
        %s882 = scalar_lea.vmem [#allocation4], %s881
        // Predicated region
        $region113: #{residual_block_forward.3} parent=103 // pred_check
          %p883 = pneg %p127
        $region114: #{residual_block_forward.3} parent=103 // pred_check_branch
          %885 = sbr.rel (%p883) target = $region116
        $region115: #{residual_block_forward.3} parent=103 // pred_region
          %s886 = smul.u32 2, %s15
          %s887 = smul.addr %s886, 4
          %s888 = scalar_lea.vmem %s4, %s887
          // Predicated region
          $region117: #{residual_block_forward.3} parent=115 // pred_check
            _
          $region118: #{residual_block_forward.3} parent=115 // pred_check_branch
            %890 = sbr.rel (0) target = $region120
          $region119: #{residual_block_forward.3} parent=115 // pred_region
            // Predicated region
            $region121: #{residual_block_forward.3} parent=119 // pred_check
              _
            $region122: #{residual_block_forward.3} parent=119 // pred_check_branch
              %892 = sbr.rel (0) target = $region124
            $region123: #{residual_block_forward.3} parent=119 // pred_region
              // Predicated region
              $region136: #{residual_block_forward.3} parent=123 // pred_check
                _
              $region137: #{residual_block_forward.3} parent=123 // pred_check_branch
                %914 = sbr.rel (0) target = $region139
              $region138: #{residual_block_forward.3} parent=123 // pred_region
                loop: start=0, step=1, limit=1
                $region140: #{residual_block_forward.3} parent=138 // loop_pre_header
                  _
                $region141: #{residual_block_forward.3} parent=138 // loop_header
                  %s916 = sphi 0, %s920
                  %p917 = scmp.ge.s32.totalorder %s916, 1
                  %s921 = sphi %s882, %s882
                  %s922 = sphi %s888, %s888
                $region142: #{residual_block_forward.3} parent=138 // loop_header_branch
                  %919 = sbr.rel (%p917) target = $region146
                $region143: #{residual_block_forward.3} parent=138 // loop_body
                  %v923 = vld [vmem:[%s921] sm:$0xff]
                  %924 = vst [vmem:[%s922] sm:$0xff] %v923
                  %v925 = vld [vmem:[%s921 + $0x8] sm:$0xff]
                  %926 = vst [vmem:[%s922 + $0x10] sm:$0xff] %v925
                  %v927 = vld [vmem:[%s921 + $0x10] sm:$0xff]
                  %928 = vst [vmem:[%s922 + $0x20] sm:$0xff] %v927
                  %v929 = vld [vmem:[%s921 + $0x18] sm:$0xff]
                  %930 = vst [vmem:[%s922 + $0x30] sm:$0xff] %v929
                $region144: #{residual_block_forward.3} parent=138 // loop_footer
                  %s920 = sadd.s32 1, %s916
                $region145: #{residual_block_forward.3} parent=138 // loop_footer_branch
                  %915 = sbr.rel target = $region141
                $region146: #{residual_block_forward.3} parent=138 // loop_exit
                  _
              $region139: #{residual_block_forward.3} parent=123 // pred_fallthru
                _
              // Predicated region
              $region147: #{residual_block_forward.3} parent=123 // pred_check
                _
              $region148: #{residual_block_forward.3} parent=123 // pred_check_branch
                %932 = sbr.rel target = $region150
              $region149: #{residual_block_forward.3} parent=123 // pred_region
                _
              $region150: #{residual_block_forward.3} parent=123 // pred_fallthru
                _
            $region124: #{residual_block_forward.3} parent=119 // pred_fallthru
              _
            // Predicated region
            $region125: #{residual_block_forward.3} parent=119 // pred_check
              _
            $region126: #{residual_block_forward.3} parent=119 // pred_check_branch
              %894 = sbr.rel target = $region128
            $region127: #{residual_block_forward.3} parent=119 // pred_region
              %s896 = ssub.s32 256, 1
              loop: start=0, step=1, limit=1
              $region129: #{residual_block_forward.3} parent=127 // loop_pre_header
                _
              $region130: #{residual_block_forward.3} parent=127 // loop_header
                %s898 = sphi 0, %s902
                %p899 = scmp.ge.s32.totalorder %s898, 1
                %s903 = sphi %s882, %s882
                %s904 = sphi %s888, %s888
              $region131: #{residual_block_forward.3} parent=127 // loop_header_branch
                %901 = sbr.rel (%p899) target = $region135
              $region132: #{residual_block_forward.3} parent=127 // loop_body
                %v905 = vld [vmem:[%s903] sm:%s896]
                %906 = vst [vmem:[%s904] sm:%s896] %v905
                %v907 = vld [vmem:[%s903 + $0x8] sm:%s896]
                %908 = vst [vmem:[%s904 + $0x10] sm:%s896] %v907
                %v909 = vld [vmem:[%s903 + $0x10] sm:%s896]
                %910 = vst [vmem:[%s904 + $0x20] sm:%s896] %v909
                %v911 = vld [vmem:[%s903 + $0x18] sm:%s896]
                %912 = vst [vmem:[%s904 + $0x30] sm:%s896] %v911
              $region133: #{residual_block_forward.3} parent=127 // loop_footer
                %s902 = sadd.s32 1, %s898
              $region134: #{residual_block_forward.3} parent=127 // loop_footer_branch
                %897 = sbr.rel target = $region130
              $region135: #{residual_block_forward.3} parent=127 // loop_exit
                _
            $region128: #{residual_block_forward.3} parent=119 // pred_fallthru
              _
          $region120: #{residual_block_forward.3} parent=115 // pred_fallthru
            _
          %933 = vnop
        $region116: #{residual_block_forward.3} parent=103 // pred_fallthru
          _
      $region104: #{residual_block_forward.3} parent=5 // pred_fallthru
        _
      %p934 = scmp.le.s32.totalorder 2, %s10
      // Predicated region
      $region151: #{residual_block_forward.3} parent=5 // pred_check
        %p935 = pneg %p934
      $region152: #{residual_block_forward.3} parent=5 // pred_check_branch
        %937 = sbr.rel (%p935) target = $region154
      $region153: #{residual_block_forward.3} parent=5 // pred_region
        %s938 = ssub.s32 %s10, 2
        // Predicated region
        $region155: #{residual_block_forward.3} parent=153 // pred_check
          %p939 = pneg %p133
        $region156: #{residual_block_forward.3} parent=153 // pred_check_branch
          %941 = sbr.rel (%p939) target = $region158
        $region157: #{residual_block_forward.3} parent=153 // pred_region
          %s942 = sand.u32 %s118, 1
          %s943 = sand.u32 %s118, 1
          %s944 = smul.addr %s943, 32
          %s945 = scalar_lea.vmem [#allocation4], %s944
        $region158: #{residual_block_forward.3} parent=153 // pred_fallthru
          _
      $region154: #{residual_block_forward.3} parent=5 // pred_fallthru
        _
    $region6: #{residual_block_forward.3} parent=1 // loop_footer
      %s14 = sadd.s32 1, %s10
    $region7: #{residual_block_forward.3} parent=1 // loop_footer_branch
      %9 = sbr.rel target = $region3
    $region8: #{residual_block_forward.3} parent=1 // loop_exit
      _

</llo_original>
